<compile_context>
chip_gen: v5e
topology: v5e:2x2
jax: 0.10.0
libtpu: 0.0.40
codegen_flags: <defaults>
</compile_context>

<pallas_src>
import functools

import jax
import jax.numpy as jnp
from jax import lax
from jax.experimental import pallas as pl
from jax.experimental.pallas import tpu as pltpu


# ----------------------------------------------------------------------------
# In-kernel math helpers (f32)
# ----------------------------------------------------------------------------
def _layernorm(x, w, b, eps):
    mu = jnp.mean(x, axis=-1, keepdims=True)
    var = jnp.mean((x - mu) ** 2, axis=-1, keepdims=True)
    return (x - mu) * lax.rsqrt(var + eps) * w + b


def _gelu_tanh(x):
    c = jnp.sqrt(2.0 / jnp.pi).astype(x.dtype)
    return 0.5 * x * (1.0 + jnp.tanh(c * (x + 0.044715 * x * x * x)))


# ----------------------------------------------------------------------------
# Fused kernel: patch-embed (l==0) -> encoder layer l -> post-LN (l==L-1)
# ----------------------------------------------------------------------------
def siglip_fused_kernel(
    patches_ref, pw_ref, pb_ref, pos_ref,
    ln1w_ref, ln1b_ref, qkv_w_ref, qkv_b_ref, ow_ref, ob_ref,
    ln2w_ref, ln2b_ref, fc1w_ref, fc1b_ref, fc2w_ref, fc2b_ref,
    plnw_ref, plnb_ref,
    out_ref,
    x_scr, ctx_scr,
    *, num_heads, eps):
    l = pl.program_id(1)
    n_layers = pl.num_programs(1)
    Bt, S, D = x_scr.shape
    hd = D // num_heads
    BS = Bt * S

    # ---- first layer step: patch embedding (conv as matmul) + pos embed ----
    @pl.when(l == 0)
    def _():
        p = patches_ref[...].astype(jnp.bfloat16)          # (Bt, S, C*P*P)
        p = p.reshape(BS, p.shape[-1])
        emb = jnp.dot(p, pw_ref[...],
                      preferred_element_type=jnp.float32)  # (BS, D) f32
        x_scr[...] = emb.reshape(Bt, S, D) + pb_ref[...] + pos_ref[...]

    x2 = x_scr[...].reshape(BS, D)                         # f32 residual stream

    # ------------------------- self-attention (pre-LN) -----------------------
    h = _layernorm(x2, ln1w_ref[0], ln1b_ref[0], eps).astype(jnp.bfloat16)
    qkv = jnp.dot(h, qkv_w_ref[0],
                  preferred_element_type=jnp.float32) + qkv_b_ref[0]   # (BS, 3D)
    qkv = qkv.astype(jnp.bfloat16)      # drop to bf16 right after bias add
    # attention scale is pre-folded into the Q weight columns at init time
    q = qkv[:, :D].reshape(Bt, S, D)
    k = qkv[:, D:2 * D].reshape(Bt, S, D)
    v = qkv[:, 2 * D:].reshape(Bt, S, D)

    # Per (image, head): one (S, S) score tile live at a time; the head output
    # is written to the bf16 context scratch at its head offset so the output
    # projection below runs as a single K = D matmul (good MXU utilization).
    for b in range(Bt):
        for hh in range(num_heads):
            c0 = hh * hd
            qs = q[b, :, c0:c0 + hd]
            ks = k[b, :, c0:c0 + hd]
            vs = v[b, :, c0:c0 + hd]
            # contract on head_dim for BOTH operands (no k.T materialization)
            s = lax.dot_general(qs, ks, (((1,), (1,)), ((), ())),
                                preferred_element_type=jnp.float32)    # (S, S)
            s = s - jnp.max(s, axis=-1, keepdims=True)
            e = jnp.exp(s)
            p_attn = e * pl.reciprocal(jnp.sum(e, axis=-1, keepdims=True),
                                       approx=True)
            ho = jnp.dot(p_attn.astype(jnp.bfloat16), vs,
                         preferred_element_type=jnp.float32)           # (S, hd)
            ctx_scr[b, :, c0:c0 + hd] = ho.astype(jnp.bfloat16)

    ctx = ctx_scr[...].reshape(BS, D)                                  # bf16
    attn = jnp.dot(ctx, ow_ref[0],
                   preferred_element_type=jnp.float32) + ob_ref[0]
    x2 = x2 + attn

    # ------------------------------ MLP (pre-LN) -----------------------------
    h = _layernorm(x2, ln2w_ref[0], ln2b_ref[0], eps).astype(jnp.bfloat16)
    h1 = jnp.dot(h, fc1w_ref[0],
                 preferred_element_type=jnp.float32) + fc1b_ref[0]     # (BS, I)
    h1 = _gelu_tanh(h1)
    h2 = jnp.dot(h1.astype(jnp.bfloat16), fc2w_ref[0],
                 preferred_element_type=jnp.float32) + fc2b_ref[0]
    x2 = x2 + h2

    x_scr[...] = x2.reshape(Bt, S, D)

    # ---- final post-LayerNorm, fused into the last layer iteration ----
    @pl.when(l == n_layers - 1)
    def _():
        y = _layernorm(x_scr[...].reshape(BS, D), plnw_ref[...], plnb_ref[...], eps)
        out_ref[...] = y.reshape(Bt, S, D).astype(out_ref.dtype)


# ----------------------------------------------------------------------------
# pallas_call wrapper
# ----------------------------------------------------------------------------
def _vmem_limit_bytes():
    # Default scoped VMEM (16 MiB v5e, 32 MiB v6e/v7x) is far below what the
    # layer-resident design needs; raise it, leaving headroom below physical.
    try:
        cap = int(pltpu.get_tpu_info().vmem_capacity_bytes)
    except Exception:  # pragma: no cover - conservative fallback
        cap = 128 * 1024 * 1024
    return int(min(cap * 85 // 100, 110 * 1024 * 1024))


def siglip_vision_forward(pixel_values, params, cfg, *, batch_tile=None):
    patches = extract_patches(pixel_values, cfg["patch_size"])   # (B, S, CPP)
    B, S, CPP = patches.shape
    D = cfg["hidden_size"]
    I = cfg["intermediate_size"]
    L = cfg["num_hidden_layers"]
    H = cfg["num_attention_heads"]
    eps = cfg["layer_norm_eps"]

    # Amortize layer-weight streaming over several images per batch block.
    if batch_tile is None:
        batch_tile = 2 if (B % 2 == 0 and B >= 2) else 1
    Bt = batch_tile
    assert B % Bt == 0, (B, Bt)

    def fixed(shape):
        nd = len(shape)
        return pl.BlockSpec(shape, lambda b, l, _nd=nd: (0,) * _nd)

    def per_layer(shape):
        blk = (1,) + tuple(shape[1:])
        nd = len(shape)
        return pl.BlockSpec(blk, lambda b, l, _nd=nd: (l,) + (0,) * (_nd - 1))

    sp = params
    in_specs = [
        pl.BlockSpec((Bt, S, CPP), lambda b, l: (b, 0, 0)),   # patches
        fixed(sp["patch_w"].shape),
        fixed(sp["patch_b"].shape),
        fixed(sp["pos_emb"].shape),
        per_layer(sp["ln1_w"].shape),
        per_layer(sp["ln1_b"].shape),
        per_layer(sp["qkv_w"].shape),
        per_layer(sp["qkv_b"].shape),
        per_layer(sp["o_w"].shape),
        per_layer(sp["o_b"].shape),
        per_layer(sp["ln2_w"].shape),
        per_layer(sp["ln2_b"].shape),
        per_layer(sp["fc1_w"].shape),
        per_layer(sp["fc1_b"].shape),
        per_layer(sp["fc2_w"].shape),
        per_layer(sp["fc2_b"].shape),
        fixed(sp["post_ln_w"].shape),
        fixed(sp["post_ln_b"].shape),
    ]

    grid_spec = pltpu.PrefetchScalarGridSpec(
        num_scalar_prefetch=0,
        grid=(B // Bt, L),                                    # layer axis last
        in_specs=in_specs,
        out_specs=pl.BlockSpec((Bt, S, D), lambda b, l: (b, 0, 0)),
        scratch_shapes=[
            pltpu.VMEM((Bt, S, D), jnp.float32),    # f32 residual stream
            pltpu.VMEM((Bt, S, D), jnp.bfloat16),   # attention context (head concat)
        ])

    # Advisory cost estimate so XLA schedules surrounding ops sensibly.
    flops = (2 * B * S * CPP * D
             + B * L * (2 * S * D * 3 * D      # QKV
                        + 4 * S * S * D        # scores + p@v (all heads)
                        + 2 * S * D * D        # output projection
                        + 4 * S * D * I))      # MLP
    transcendentals = B * L * (H * S * S + S * I)
    weight_bytes = sum(int(v.size) * v.dtype.itemsize for v in sp.values())
    bytes_accessed = (weight_bytes * max(1, B // Bt)
                      + int(patches.size) * 4 + B * S * D * 2)

    kern = functools.partial(siglip_fused_kernel, num_heads=H, eps=eps)
    return pl.pallas_call(
        kern,
        out_shape=jax.ShapeDtypeStruct((B, S, D), jnp.bfloat16),
        grid_spec=grid_spec,
        compiler_params=pltpu.CompilerParams(
            dimension_semantics=("parallel", "arbitrary"),
            vmem_limit_bytes=_vmem_limit_bytes()),
        cost_estimate=pl.CostEstimate(
            flops=int(flops),
            transcendentals=int(transcendentals),
            bytes_accessed=int(bytes_accessed)),
    )(
        patches,
        sp["patch_w"], sp["patch_b"], sp["pos_emb"],
        sp["ln1_w"], sp["ln1_b"], sp["qkv_w"], sp["qkv_b"],
        sp["o_w"], sp["o_b"], sp["ln2_w"], sp["ln2_b"],
        sp["fc1_w"], sp["fc1_b"], sp["fc2_w"], sp["fc2_b"],
        sp["post_ln_w"], sp["post_ln_b"],
    )


# ----------------------------------------------------------------------------
# Model glue (plain JAX): patch extraction + parameter setup
# ----------------------------------------------------------------------------
def extract_patches(pixel_values, patch_size):
    # NCHW -> (B, S, C*P*P), row-major over the (H/P, W/P) patch grid,
    # matching conv(stride=P).flatten(2).transpose(1, 2).
    B, C, H, W = pixel_values.shape
    P = patch_size
    x = pixel_values.reshape(B, C, H // P, P, W // P, P)
    x = x.transpose(0, 2, 4, 1, 3, 5)               # (B, H/P, W/P, C, P, P)
    return x.reshape(B, (H // P) * (W // P), C * P * P)


def init_params(key, cfg):
    D = cfg["hidden_size"]
    I = cfg["intermediate_size"]
    C = cfg["num_channels"]
    P = cfg["patch_size"]
    L = cfg["num_hidden_layers"]
    H = cfg["num_attention_heads"]
    S = (cfg["image_size"] // P) ** 2
    std = 0.02
    attn_scale = float(D // H) ** -0.5

    def nrm(k, shape):
        return std * jax.random.normal(k, shape, dtype=jnp.float32)

    keys = jax.random.split(key, 10)

    # Conv2d weight (D, C, P, P) folded into a (C*P*P, D) matmul weight (bf16).
    patch_w = nrm(keys[0], (D, C, P, P)).reshape(D, C * P * P).T.astype(jnp.bfloat16)
    patch_b = nrm(keys[1], (1, D))
    pos_emb = nrm(keys[2], (S, D))                  # nn.Embedding(S, D)

    def stack(k, shape):
        ks = jax.random.split(k, L)
        return jnp.stack([nrm(kk, shape) for kk in ks])

    # nn.Linear weights are (out, in); store pre-transposed (in, out), bf16.
    # Attention scale (head_dim**-0.5) folded into the Q columns (free at init).
    wq = stack(keys[3], (D, D)).transpose(0, 2, 1) * attn_scale
    wk = stack(keys[4], (D, D)).transpose(0, 2, 1)
    wv = stack(keys[5], (D, D)).transpose(0, 2, 1)
    qkv_w = jnp.concatenate([wq, wk, wv], axis=-1).astype(jnp.bfloat16)   # (L, D, 3D)
    # q bias is zero here; with real checkpoints, scale the first D bias entries too.
    qkv_b = jnp.zeros((L, 1, 3 * D), jnp.float32)
    o_w = stack(keys[6], (D, D)).transpose(0, 2, 1).astype(jnp.bfloat16)    # (L, D, D)
    fc1_w = stack(keys[7], (I, D)).transpose(0, 2, 1).astype(jnp.bfloat16)  # (L, D, I)
    fc2_w = stack(keys[8], (D, I)).transpose(0, 2, 1).astype(jnp.bfloat16)  # (L, I, D)

    return {
        "patch_w": patch_w, "patch_b": patch_b, "pos_emb": pos_emb,
        "ln1_w": jnp.ones((L, 1, D), jnp.float32),
        "ln1_b": jnp.zeros((L, 1, D), jnp.float32),
        "qkv_w": qkv_w,
        "qkv_b": qkv_b,
        "o_w": o_w,
        "o_b": jnp.zeros((L, 1, D), jnp.float32),
        "ln2_w": jnp.ones((L, 1, D), jnp.float32),
        "ln2_b": jnp.zeros((L, 1, D), jnp.float32),
        "fc1_w": fc1_w,
        "fc1_b": jnp.zeros((L, 1, I), jnp.float32),
        "fc2_w": fc2_w,
        "fc2_b": jnp.zeros((L, 1, D), jnp.float32),
        "post_ln_w": jnp.ones((1, D), jnp.float32),
        "post_ln_b": jnp.zeros((1, D), jnp.float32),
    }


# ----------------------------------------------------------------------------
if __name__ == "__main__":
    cfg = dict(
        hidden_size=32,
        intermediate_size=64,
        num_hidden_layers=2,
        num_attention_heads=4,
        num_channels=3,
        image_size=16,
        patch_size=4,
        layer_norm_eps=1e-6,
    )
    S = (cfg["image_size"] // cfg["patch_size"]) ** 2  # 16 patches

    key = jax.random.PRNGKey(0)
    k_params, k_input = jax.random.split(key)
    params = init_params(k_params, cfg)
    pixel_values = jax.random.normal(
        k_input, (2, cfg["num_channels"], cfg["image_size"], cfg["image_size"]),
        dtype=jnp.float32)

    fwd = jax.jit(lambda px, prm: siglip_vision_forward(px, prm, cfg))
    out = jax.block_until_ready(fwd(pixel_values, params))

    assert out.shape == (2, S, cfg["hidden_size"]), out.shape
    assert bool(jnp.all(jnp.isfinite(out.astype(jnp.float32))))
    print("KERNEL_OK")
</pallas_src>

<mosaic_0001>
module attributes {stable_mosaic.version = 11 : i64} {
  func.func @siglip_fused_kernel(%arg0: i32, %arg1: i32, %arg2: memref<2x16x48xf32, #tpu.memory_space<vmem>>, %arg3: memref<48x32xbf16, #tpu.memory_space<vmem>>, %arg4: memref<1x32xf32, #tpu.memory_space<vmem>>, %arg5: memref<16x32xf32, #tpu.memory_space<vmem>>, %arg6: memref<1x1x32xf32, #tpu.memory_space<vmem>>, %arg7: memref<1x1x32xf32, #tpu.memory_space<vmem>>, %arg8: memref<1x32x96xbf16, #tpu.memory_space<vmem>>, %arg9: memref<1x1x96xf32, #tpu.memory_space<vmem>>, %arg10: memref<1x32x32xbf16, #tpu.memory_space<vmem>>, %arg11: memref<1x1x32xf32, #tpu.memory_space<vmem>>, %arg12: memref<1x1x32xf32, #tpu.memory_space<vmem>>, %arg13: memref<1x1x32xf32, #tpu.memory_space<vmem>>, %arg14: memref<1x32x64xbf16, #tpu.memory_space<vmem>>, %arg15: memref<1x1x64xf32, #tpu.memory_space<vmem>>, %arg16: memref<1x64x32xbf16, #tpu.memory_space<vmem>>, %arg17: memref<1x1x32xf32, #tpu.memory_space<vmem>>, %arg18: memref<1x32xf32, #tpu.memory_space<vmem>>, %arg19: memref<1x32xf32, #tpu.memory_space<vmem>>, %arg20: memref<2x16x32xbf16, #tpu.memory_space<vmem>>, %arg21: memref<2x16x32xf32, #tpu.memory_space<vmem>>, %arg22: memref<2x16x32xbf16, #tpu.memory_space<vmem>>) attributes {dimension_semantics = [#tpu.dimension_semantics<parallel>, #tpu.dimension_semantics<arbitrary>], iteration_bounds = array<i64: 1, 2>, scalar_prefetch = 0 : i64, scratch_operands = 2 : i64, tpu.core_type = #tpu.core_type<tc>, window_params = [{transform_indices = @transform_0, window_bounds = array<i64: 2, 16, 48>}, {pipeline_mode = #tpu.pipeline_mode<synchronous>, transform_indices = @transform_1, window_bounds = array<i64: 48, 32>}, {pipeline_mode = #tpu.pipeline_mode<synchronous>, transform_indices = @transform_2, window_bounds = array<i64: 1, 32>}, {pipeline_mode = #tpu.pipeline_mode<synchronous>, transform_indices = @transform_3, window_bounds = array<i64: 16, 32>}, {transform_indices = @transform_4, window_bounds = array<i64: 1, 1, 32>}, {transform_indices = @transform_5, window_bounds = array<i64: 1, 1, 32>}, {transform_indices = @transform_6, window_bounds = array<i64: 1, 32, 96>}, {transform_indices = @transform_7, window_bounds = array<i64: 1, 1, 96>}, {transform_indices = @transform_8, window_bounds = array<i64: 1, 32, 32>}, {transform_indices = @transform_9, window_bounds = array<i64: 1, 1, 32>}, {transform_indices = @transform_10, window_bounds = array<i64: 1, 1, 32>}, {transform_indices = @transform_11, window_bounds = array<i64: 1, 1, 32>}, {transform_indices = @transform_12, window_bounds = array<i64: 1, 32, 64>}, {transform_indices = @transform_13, window_bounds = array<i64: 1, 1, 64>}, {transform_indices = @transform_14, window_bounds = array<i64: 1, 64, 32>}, {transform_indices = @transform_15, window_bounds = array<i64: 1, 1, 32>}, {pipeline_mode = #tpu.pipeline_mode<synchronous>, transform_indices = @transform_16, window_bounds = array<i64: 1, 32>}, {pipeline_mode = #tpu.pipeline_mode<synchronous>, transform_indices = @transform_17, window_bounds = array<i64: 1, 32>}, {transform_indices = @transform_18, window_bounds = array<i64: 2, 16, 32>}]} {
    %c0_i32 = arith.constant 0 : i32
    %0 = arith.cmpi eq, %arg1, %c0_i32 : i32
    %1 = arith.extui %0 : i1 to i32
    %c0_i32_0 = arith.constant 0 : i32
    %2 = arith.cmpi ne, %1, %c0_i32_0 : i32
    scf.if %2 {
      %c0_115 = arith.constant 0 : index
      %c0_116 = arith.constant 0 : index
      %c0_117 = arith.constant 0 : index
      %302 = vector.load %arg2[%c0_115, %c0_116, %c0_117] : memref<2x16x48xf32, #tpu.memory_space<vmem>>, vector<2x16x48xf32>
      %303 = arith.truncf %302 : vector<2x16x48xf32> to vector<2x16x48xbf16>
      %304 = vector.shape_cast %303 : vector<2x16x48xbf16> to vector<32x48xbf16>
      %c0_118 = arith.constant 0 : index
      %c0_119 = arith.constant 0 : index
      %305 = vector.load %arg3[%c0_118, %c0_119] : memref<48x32xbf16, #tpu.memory_space<vmem>>, vector<48x32xbf16>
      %cst_120 = arith.constant dense<0.000000e+00> : vector<32x32xf32>
      %306 = tpu.matmul %304, %305, %cst_120 {dimension_numbers = #tpu.dot_dimension_numbers<[1], [0], [0], [1], [0, 0, 1, 1], [], []>} : vector<32x48xbf16>, vector<48x32xbf16>, vector<32x32xf32> -> vector<32x32xf32>
      %307 = vector.shape_cast %306 : vector<32x32xf32> to vector<2x16x32xf32>
      %c0_121 = arith.constant 0 : index
      %c0_122 = arith.constant 0 : index
      %308 = vector.load %arg4[%c0_121, %c0_122] : memref<1x32xf32, #tpu.memory_space<vmem>>, vector<1x32xf32>
      %309 = vector.shape_cast %308 : vector<1x32xf32> to vector<1x1x32xf32>
      %310 = vector.broadcast %309 : vector<1x1x32xf32> to vector<2x16x32xf32>
      %311 = arith.addf %307, %310 : vector<2x16x32xf32>
      %c0_123 = arith.constant 0 : index
      %c0_124 = arith.constant 0 : index
      %312 = vector.load %arg5[%c0_123, %c0_124] : memref<16x32xf32, #tpu.memory_space<vmem>>, vector<16x32xf32>
      %313 = vector.shape_cast %312 : vector<16x32xf32> to vector<1x16x32xf32>
      %314 = vector.broadcast %313 : vector<1x16x32xf32> to vector<2x16x32xf32>
      %315 = arith.addf %311, %314 : vector<2x16x32xf32>
      %c0_125 = arith.constant 0 : index
      %c0_126 = arith.constant 0 : index
      %c0_127 = arith.constant 0 : index
      %316 = vector.load %arg21[%c0_125, %c0_126, %c0_127] : memref<2x16x32xf32, #tpu.memory_space<vmem>>, vector<2x16x32xf32>
      tpu.vector_store %arg21[%c0_125, %c0_126, %c0_127], %315 {strides = array<i32>} : memref<2x16x32xf32, #tpu.memory_space<vmem>>, vector<2x16x32xf32>,
    } else {
    }
    %c0 = arith.constant 0 : index
    %c0_1 = arith.constant 0 : index
    %c0_2 = arith.constant 0 : index
    %3 = vector.load %arg21[%c0, %c0_1, %c0_2] : memref<2x16x32xf32, #tpu.memory_space<vmem>>, vector<2x16x32xf32>
    %4 = vector.shape_cast %3 : vector<2x16x32xf32> to vector<32x32xf32>
    %c0_3 = arith.constant 0 : index
    %c0_4 = arith.constant 0 : index
    %c0_5 = arith.constant 0 : index
    %5 = vector.load %arg6[%c0_3, %c0_4, %c0_5] : memref<1x1x32xf32, #tpu.memory_space<vmem>>, vector<1x1x32xf32>
    %6 = vector.shape_cast %5 : vector<1x1x32xf32> to vector<1x32xf32>
    %c0_6 = arith.constant 0 : index
    %c0_7 = arith.constant 0 : index
    %c0_8 = arith.constant 0 : index
    %7 = vector.load %arg7[%c0_6, %c0_7, %c0_8] : memref<1x1x32xf32, #tpu.memory_space<vmem>>, vector<1x1x32xf32>
    %8 = vector.shape_cast %7 : vector<1x1x32xf32> to vector<1x32xf32>
    %cst = arith.constant dense<0.000000e+00> : vector<32xf32>
    %9 = vector.multi_reduction <add>, %4, %cst [1] : vector<32x32xf32> to vector<32xf32>
    %10 = vector.shape_cast %9 : vector<32xf32> to vector<32x1xf32>
    %cst_9 = arith.constant 3.200000e+01 : f32
    %11 = vector.broadcast %cst_9 : f32 to vector<32x1xf32>
    %12 = arith.divf %10, %11 : vector<32x1xf32>
    %13 = vector.broadcast %12 : vector<32x1xf32> to vector<32x32xf32>
    %14 = arith.subf %4, %13 : vector<32x32xf32>
    %15 = arith.mulf %14, %14 : vector<32x32xf32>
    %cst_10 = arith.constant dense<0.000000e+00> : vector<32xf32>
    %16 = vector.multi_reduction <add>, %15, %cst_10 [1] : vector<32x32xf32> to vector<32xf32>
    %17 = vector.shape_cast %16 : vector<32xf32> to vector<32x1xf32>
    %cst_11 = arith.constant 3.200000e+01 : f32
    %18 = vector.broadcast %cst_11 : f32 to vector<32x1xf32>
    %19 = arith.divf %17, %18 : vector<32x1xf32>
    %20 = vector.broadcast %12 : vector<32x1xf32> to vector<32x32xf32>
    %21 = arith.subf %4, %20 : vector<32x32xf32>
    %cst_12 = arith.constant 9.99999997E-7 : f32
    %22 = vector.broadcast %cst_12 : f32 to vector<32x1xf32>
    %23 = arith.addf %19, %22 : vector<32x1xf32>
    %24 = math.rsqrt %23 : vector<32x1xf32>
    %25 = vector.broadcast %24 : vector<32x1xf32> to vector<32x32xf32>
    %26 = arith.mulf %21, %25 : vector<32x32xf32>
    %27 = vector.broadcast %6 : vector<1x32xf32> to vector<32x32xf32>
    %28 = arith.mulf %26, %27 : vector<32x32xf32>
    %29 = vector.broadcast %8 : vector<1x32xf32> to vector<32x32xf32>
    %30 = arith.addf %28, %29 : vector<32x32xf32>
    %31 = arith.truncf %30 : vector<32x32xf32> to vector<32x32xbf16>
    %c0_13 = arith.constant 0 : index
    %c0_14 = arith.constant 0 : index
    %c0_15 = arith.constant 0 : index
    %32 = vector.load %arg8[%c0_13, %c0_14, %c0_15] : memref<1x32x96xbf16, #tpu.memory_space<vmem>>, vector<1x32x96xbf16>
    %33 = vector.shape_cast %32 : vector<1x32x96xbf16> to vector<32x96xbf16>
    %cst_16 = arith.constant dense<0.000000e+00> : vector<32x96xf32>
    %34 = tpu.matmul %31, %33, %cst_16 {dimension_numbers = #tpu.dot_dimension_numbers<[1], [0], [0], [1], [0, 0, 1, 1], [], []>} : vector<32x32xbf16>, vector<32x96xbf16>, vector<32x96xf32> -> vector<32x96xf32>
    %c0_17 = arith.constant 0 : index
    %c0_18 = arith.constant 0 : index
    %c0_19 = arith.constant 0 : index
    %35 = vector.load %arg9[%c0_17, %c0_18, %c0_19] : memref<1x1x96xf32, #tpu.memory_space<vmem>>, vector<1x1x96xf32>
    %36 = vector.shape_cast %35 : vector<1x1x96xf32> to vector<1x96xf32>
    %37 = vector.broadcast %36 : vector<1x96xf32> to vector<32x96xf32>
    %38 = arith.addf %34, %37 : vector<32x96xf32>
    %39 = arith.truncf %38 : vector<32x96xf32> to vector<32x96xbf16>
    %40 = vector.extract_strided_slice %39 {offsets = [0, 0], sizes = [32, 32], strides = [1, 1]} : vector<32x96xbf16> to vector<32x32xbf16>
    %41 = vector.shape_cast %40 : vector<32x32xbf16> to vector<2x16x32xbf16>
    %42 = vector.extract_strided_slice %39 {offsets = [0, 32], sizes = [32, 32], strides = [1, 1]} : vector<32x96xbf16> to vector<32x32xbf16>
    %43 = vector.shape_cast %42 : vector<32x32xbf16> to vector<2x16x32xbf16>
    %44 = vector.extract_strided_slice %39 {offsets = [0, 64], sizes = [32, 32], strides = [1, 1]} : vector<32x96xbf16> to vector<32x32xbf16>
    %45 = vector.shape_cast %44 : vector<32x32xbf16> to vector<2x16x32xbf16>
    %46 = vector.extract_strided_slice %41 {offsets = [0, 0, 0], sizes = [1, 16, 8], strides = [1, 1, 1]} : vector<2x16x32xbf16> to vector<1x16x8xbf16>
    %47 = vector.shape_cast %46 : vector<1x16x8xbf16> to vector<16x8xbf16>
    %48 = vector.extract_strided_slice %43 {offsets = [0, 0, 0], sizes = [1, 16, 8], strides = [1, 1, 1]} : vector<2x16x32xbf16> to vector<1x16x8xbf16>
    %49 = vector.shape_cast %48 : vector<1x16x8xbf16> to vector<16x8xbf16>
    %50 = vector.extract_strided_slice %45 {offsets = [0, 0, 0], sizes = [1, 16, 8], strides = [1, 1, 1]} : vector<2x16x32xbf16> to vector<1x16x8xbf16>
    %51 = vector.shape_cast %50 : vector<1x16x8xbf16> to vector<16x8xbf16>
    %cst_20 = arith.constant dense<0.000000e+00> : vector<16x16xf32>
    %52 = tpu.matmul %47, %49, %cst_20 {dimension_numbers = #tpu.dot_dimension_numbers<[1], [1], [0], [0], [0, 0, 1, 0], [], []>} : vector<16x8xbf16>, vector<16x8xbf16>, vector<16x16xf32> -> vector<16x16xf32>
    %cst_21 = arith.constant dense<0xFF800000> : vector<16xf32>
    %53 = vector.multi_reduction <maximumf>, %52, %cst_21 [1] : vector<16x16xf32> to vector<16xf32>
    %54 = vector.shape_cast %53 : vector<16xf32> to vector<16x1xf32>
    %55 = vector.broadcast %54 : vector<16x1xf32> to vector<16x16xf32>
    %56 = arith.subf %52, %55 : vector<16x16xf32>
    %57 = math.exp %56 : vector<16x16xf32>
    %cst_22 = arith.constant dense<0.000000e+00> : vector<16xf32>
    %58 = vector.multi_reduction <add>, %57, %cst_22 [1] : vector<16x16xf32> to vector<16xf32>
    %59 = vector.shape_cast %58 : vector<16xf32> to vector<16x1xf32>
    %60 = tpu.reciprocal %59 {approx = true} : vector<16x1xf32> -> vector<16x1xf32>
    %61 = vector.broadcast %60 : vector<16x1xf32> to vector<16x16xf32>
    %62 = arith.mulf %57, %61 : vector<16x16xf32>
    %63 = arith.truncf %62 : vector<16x16xf32> to vector<16x16xbf16>
    %cst_23 = arith.constant dense<0.000000e+00> : vector<16x8xf32>
    %64 = tpu.matmul %63, %51, %cst_23 {dimension_numbers = #tpu.dot_dimension_numbers<[1], [0], [0], [1], [0, 0, 1, 1], [], []>} : vector<16x16xbf16>, vector<16x8xbf16>, vector<16x8xf32> -> vector<16x8xf32>
    %65 = arith.truncf %64 : vector<16x8xf32> to vector<16x8xbf16>
    %c0_24 = arith.constant 0 : index
    %c0_25 = arith.constant 0 : index
    %c0_26 = arith.constant 0 : index
    %66 = vector.load %arg22[%c0_24, %c0_25, %c0_26] : memref<2x16x32xbf16, #tpu.memory_space<vmem>>, vector<1x16x8xbf16>
    %67 = vector.shape_cast %66 : vector<1x16x8xbf16> to vector<16x8xbf16>
    %68 = vector.shape_cast %65 : vector<16x8xbf16> to vector<1x16x8xbf16>
    tpu.vector_store %arg22[%c0_24, %c0_25, %c0_26], %68 {strides = array<i32>} : memref<2x16x32xbf16, #tpu.memory_space<vmem>>, vector<1x16x8xbf16>,
    %69 = vector.extract_strided_slice %41 {offsets = [0, 0, 8], sizes = [1, 16, 8], strides = [1, 1, 1]} : vector<2x16x32xbf16> to vector<1x16x8xbf16>
    %70 = vector.shape_cast %69 : vector<1x16x8xbf16> to vector<16x8xbf16>
    %71 = vector.extract_strided_slice %43 {offsets = [0, 0, 8], sizes = [1, 16, 8], strides = [1, 1, 1]} : vector<2x16x32xbf16> to vector<1x16x8xbf16>
    %72 = vector.shape_cast %71 : vector<1x16x8xbf16> to vector<16x8xbf16>
    %73 = vector.extract_strided_slice %45 {offsets = [0, 0, 8], sizes = [1, 16, 8], strides = [1, 1, 1]} : vector<2x16x32xbf16> to vector<1x16x8xbf16>
    %74 = vector.shape_cast %73 : vector<1x16x8xbf16> to vector<16x8xbf16>
    %cst_27 = arith.constant dense<0.000000e+00> : vector<16x16xf32>
    %75 = tpu.matmul %70, %72, %cst_27 {dimension_numbers = #tpu.dot_dimension_numbers<[1], [1], [0], [0], [0, 0, 1, 0], [], []>} : vector<16x8xbf16>, vector<16x8xbf16>, vector<16x16xf32> -> vector<16x16xf32>
    %cst_28 = arith.constant dense<0xFF800000> : vector<16xf32>
    %76 = vector.multi_reduction <maximumf>, %75, %cst_28 [1] : vector<16x16xf32> to vector<16xf32>
    %77 = vector.shape_cast %76 : vector<16xf32> to vector<16x1xf32>
    %78 = vector.broadcast %77 : vector<16x1xf32> to vector<16x16xf32>
    %79 = arith.subf %75, %78 : vector<16x16xf32>
    %80 = math.exp %79 : vector<16x16xf32>
    %cst_29 = arith.constant dense<0.000000e+00> : vector<16xf32>
    %81 = vector.multi_reduction <add>, %80, %cst_29 [1] : vector<16x16xf32> to vector<16xf32>
    %82 = vector.shape_cast %81 : vector<16xf32> to vector<16x1xf32>
    %83 = tpu.reciprocal %82 {approx = true} : vector<16x1xf32> -> vector<16x1xf32>
    %84 = vector.broadcast %83 : vector<16x1xf32> to vector<16x16xf32>
    %85 = arith.mulf %80, %84 : vector<16x16xf32>
    %86 = arith.truncf %85 : vector<16x16xf32> to vector<16x16xbf16>
    %cst_30 = arith.constant dense<0.000000e+00> : vector<16x8xf32>
    %87 = tpu.matmul %86, %74, %cst_30 {dimension_numbers = #tpu.dot_dimension_numbers<[1], [0], [0], [1], [0, 0, 1, 1], [], []>} : vector<16x16xbf16>, vector<16x8xbf16>, vector<16x8xf32> -> vector<16x8xf32>
    %88 = arith.truncf %87 : vector<16x8xf32> to vector<16x8xbf16>
    %c0_31 = arith.constant 0 : index
    %c0_32 = arith.constant 0 : index
    %c8 = arith.constant 8 : index
    %89 = vector.load %arg22[%c0_31, %c0_32, %c8] : memref<2x16x32xbf16, #tpu.memory_space<vmem>>, vector<1x16x8xbf16>
    %90 = vector.shape_cast %89 : vector<1x16x8xbf16> to vector<16x8xbf16>
    %91 = vector.shape_cast %88 : vector<16x8xbf16> to vector<1x16x8xbf16>
    tpu.vector_store %arg22[%c0_31, %c0_32, %c8], %91 {strides = array<i32>} : memref<2x16x32xbf16, #tpu.memory_space<vmem>>, vector<1x16x8xbf16>,
    %92 = vector.extract_strided_slice %41 {offsets = [0, 0, 16], sizes = [1, 16, 8], strides = [1, 1, 1]} : vector<2x16x32xbf16> to vector<1x16x8xbf16>
    %93 = vector.shape_cast %92 : vector<1x16x8xbf16> to vector<16x8xbf16>
    %94 = vector.extract_strided_slice %43 {offsets = [0, 0, 16], sizes = [1, 16, 8], strides = [1, 1, 1]} : vector<2x16x32xbf16> to vector<1x16x8xbf16>
    %95 = vector.shape_cast %94 : vector<1x16x8xbf16> to vector<16x8xbf16>
    %96 = vector.extract_strided_slice %45 {offsets = [0, 0, 16], sizes = [1, 16, 8], strides = [1, 1, 1]} : vector<2x16x32xbf16> to vector<1x16x8xbf16>
    %97 = vector.shape_cast %96 : vector<1x16x8xbf16> to vector<16x8xbf16>
    %cst_33 = arith.constant dense<0.000000e+00> : vector<16x16xf32>
    %98 = tpu.matmul %93, %95, %cst_33 {dimension_numbers = #tpu.dot_dimension_numbers<[1], [1], [0], [0], [0, 0, 1, 0], [], []>} : vector<16x8xbf16>, vector<16x8xbf16>, vector<16x16xf32> -> vector<16x16xf32>
    %cst_34 = arith.constant dense<0xFF800000> : vector<16xf32>
    %99 = vector.multi_reduction <maximumf>, %98, %cst_34 [1] : vector<16x16xf32> to vector<16xf32>
    %100 = vector.shape_cast %99 : vector<16xf32> to vector<16x1xf32>
    %101 = vector.broadcast %100 : vector<16x1xf32> to vector<16x16xf32>
    %102 = arith.subf %98, %101 : vector<16x16xf32>
    %103 = math.exp %102 : vector<16x16xf32>
    %cst_35 = arith.constant dense<0.000000e+00> : vector<16xf32>
    %104 = vector.multi_reduction <add>, %103, %cst_35 [1] : vector<16x16xf32> to vector<16xf32>
    %105 = vector.shape_cast %104 : vector<16xf32> to vector<16x1xf32>
    %106 = tpu.reciprocal %105 {approx = true} : vector<16x1xf32> -> vector<16x1xf32>
    %107 = vector.broadcast %106 : vector<16x1xf32> to vector<16x16xf32>
    %108 = arith.mulf %103, %107 : vector<16x16xf32>
    %109 = arith.truncf %108 : vector<16x16xf32> to vector<16x16xbf16>
    %cst_36 = arith.constant dense<0.000000e+00> : vector<16x8xf32>
    %110 = tpu.matmul %109, %97, %cst_36 {dimension_numbers = #tpu.dot_dimension_numbers<[1], [0], [0], [1], [0, 0, 1, 1], [], []>} : vector<16x16xbf16>, vector<16x8xbf16>, vector<16x8xf32> -> vector<16x8xf32>
    %111 = arith.truncf %110 : vector<16x8xf32> to vector<16x8xbf16>
    %c0_37 = arith.constant 0 : index
    %c0_38 = arith.constant 0 : index
    %c16 = arith.constant 16 : index
    %112 = vector.load %arg22[%c0_37, %c0_38, %c16] : memref<2x16x32xbf16, #tpu.memory_space<vmem>>, vector<1x16x8xbf16>
    %113 = vector.shape_cast %112 : vector<1x16x8xbf16> to vector<16x8xbf16>
    %114 = vector.shape_cast %111 : vector<16x8xbf16> to vector<1x16x8xbf16>
    tpu.vector_store %arg22[%c0_37, %c0_38, %c16], %114 {strides = array<i32>} : memref<2x16x32xbf16, #tpu.memory_space<vmem>>, vector<1x16x8xbf16>,
    %115 = vector.extract_strided_slice %41 {offsets = [0, 0, 24], sizes = [1, 16, 8], strides = [1, 1, 1]} : vector<2x16x32xbf16> to vector<1x16x8xbf16>
    %116 = vector.shape_cast %115 : vector<1x16x8xbf16> to vector<16x8xbf16>
    %117 = vector.extract_strided_slice %43 {offsets = [0, 0, 24], sizes = [1, 16, 8], strides = [1, 1, 1]} : vector<2x16x32xbf16> to vector<1x16x8xbf16>
    %118 = vector.shape_cast %117 : vector<1x16x8xbf16> to vector<16x8xbf16>
    %119 = vector.extract_strided_slice %45 {offsets = [0, 0, 24], sizes = [1, 16, 8], strides = [1, 1, 1]} : vector<2x16x32xbf16> to vector<1x16x8xbf16>
    %120 = vector.shape_cast %119 : vector<1x16x8xbf16> to vector<16x8xbf16>
    %cst_39 = arith.constant dense<0.000000e+00> : vector<16x16xf32>
    %121 = tpu.matmul %116, %118, %cst_39 {dimension_numbers = #tpu.dot_dimension_numbers<[1], [1], [0], [0], [0, 0, 1, 0], [], []>} : vector<16x8xbf16>, vector<16x8xbf16>, vector<16x16xf32> -> vector<16x16xf32>
    %cst_40 = arith.constant dense<0xFF800000> : vector<16xf32>
    %122 = vector.multi_reduction <maximumf>, %121, %cst_40 [1] : vector<16x16xf32> to vector<16xf32>
    %123 = vector.shape_cast %122 : vector<16xf32> to vector<16x1xf32>
    %124 = vector.broadcast %123 : vector<16x1xf32> to vector<16x16xf32>
    %125 = arith.subf %121, %124 : vector<16x16xf32>
    %126 = math.exp %125 : vector<16x16xf32>
    %cst_41 = arith.constant dense<0.000000e+00> : vector<16xf32>
    %127 = vector.multi_reduction <add>, %126, %cst_41 [1] : vector<16x16xf32> to vector<16xf32>
    %128 = vector.shape_cast %127 : vector<16xf32> to vector<16x1xf32>
    %129 = tpu.reciprocal %128 {approx = true} : vector<16x1xf32> -> vector<16x1xf32>
    %130 = vector.broadcast %129 : vector<16x1xf32> to vector<16x16xf32>
    %131 = arith.mulf %126, %130 : vector<16x16xf32>
    %132 = arith.truncf %131 : vector<16x16xf32> to vector<16x16xbf16>
    %cst_42 = arith.constant dense<0.000000e+00> : vector<16x8xf32>
    %133 = tpu.matmul %132, %120, %cst_42 {dimension_numbers = #tpu.dot_dimension_numbers<[1], [0], [0], [1], [0, 0, 1, 1], [], []>} : vector<16x16xbf16>, vector<16x8xbf16>, vector<16x8xf32> -> vector<16x8xf32>
    %134 = arith.truncf %133 : vector<16x8xf32> to vector<16x8xbf16>
    %c0_43 = arith.constant 0 : index
    %c0_44 = arith.constant 0 : index
    %c24 = arith.constant 24 : index
    %135 = vector.load %arg22[%c0_43, %c0_44, %c24] : memref<2x16x32xbf16, #tpu.memory_space<vmem>>, vector<1x16x8xbf16>
    %136 = vector.shape_cast %135 : vector<1x16x8xbf16> to vector<16x8xbf16>
    %137 = vector.shape_cast %134 : vector<16x8xbf16> to vector<1x16x8xbf16>
    tpu.vector_store %arg22[%c0_43, %c0_44, %c24], %137 {strides = array<i32>} : memref<2x16x32xbf16, #tpu.memory_space<vmem>>, vector<1x16x8xbf16>,
    %138 = vector.extract_strided_slice %41 {offsets = [1, 0, 0], sizes = [1, 16, 8], strides = [1, 1, 1]} : vector<2x16x32xbf16> to vector<1x16x8xbf16>
    %139 = vector.shape_cast %138 : vector<1x16x8xbf16> to vector<16x8xbf16>
    %140 = vector.extract_strided_slice %43 {offsets = [1, 0, 0], sizes = [1, 16, 8], strides = [1, 1, 1]} : vector<2x16x32xbf16> to vector<1x16x8xbf16>
    %141 = vector.shape_cast %140 : vector<1x16x8xbf16> to vector<16x8xbf16>
    %142 = vector.extract_strided_slice %45 {offsets = [1, 0, 0], sizes = [1, 16, 8], strides = [1, 1, 1]} : vector<2x16x32xbf16> to vector<1x16x8xbf16>
    %143 = vector.shape_cast %142 : vector<1x16x8xbf16> to vector<16x8xbf16>
    %cst_45 = arith.constant dense<0.000000e+00> : vector<16x16xf32>
    %144 = tpu.matmul %139, %141, %cst_45 {dimension_numbers = #tpu.dot_dimension_numbers<[1], [1], [0], [0], [0, 0, 1, 0], [], []>} : vector<16x8xbf16>, vector<16x8xbf16>, vector<16x16xf32> -> vector<16x16xf32>
    %cst_46 = arith.constant dense<0xFF800000> : vector<16xf32>
    %145 = vector.multi_reduction <maximumf>, %144, %cst_46 [1] : vector<16x16xf32> to vector<16xf32>
    %146 = vector.shape_cast %145 : vector<16xf32> to vector<16x1xf32>
    %147 = vector.broadcast %146 : vector<16x1xf32> to vector<16x16xf32>
    %148 = arith.subf %144, %147 : vector<16x16xf32>
    %149 = math.exp %148 : vector<16x16xf32>
    %cst_47 = arith.constant dense<0.000000e+00> : vector<16xf32>
    %150 = vector.multi_reduction <add>, %149, %cst_47 [1] : vector<16x16xf32> to vector<16xf32>
    %151 = vector.shape_cast %150 : vector<16xf32> to vector<16x1xf32>
    %152 = tpu.reciprocal %151 {approx = true} : vector<16x1xf32> -> vector<16x1xf32>
    %153 = vector.broadcast %152 : vector<16x1xf32> to vector<16x16xf32>
    %154 = arith.mulf %149, %153 : vector<16x16xf32>
    %155 = arith.truncf %154 : vector<16x16xf32> to vector<16x16xbf16>
    %cst_48 = arith.constant dense<0.000000e+00> : vector<16x8xf32>
    %156 = tpu.matmul %155, %143, %cst_48 {dimension_numbers = #tpu.dot_dimension_numbers<[1], [0], [0], [1], [0, 0, 1, 1], [], []>} : vector<16x16xbf16>, vector<16x8xbf16>, vector<16x8xf32> -> vector<16x8xf32>
    %157 = arith.truncf %156 : vector<16x8xf32> to vector<16x8xbf16>
    %c1 = arith.constant 1 : index
    %c0_49 = arith.constant 0 : index
    %c0_50 = arith.constant 0 : index
    %158 = vector.load %arg22[%c1, %c0_49, %c0_50] : memref<2x16x32xbf16, #tpu.memory_space<vmem>>, vector<1x16x8xbf16>
    %159 = vector.shape_cast %158 : vector<1x16x8xbf16> to vector<16x8xbf16>
    %160 = vector.shape_cast %157 : vector<16x8xbf16> to vector<1x16x8xbf16>
    tpu.vector_store %arg22[%c1, %c0_49, %c0_50], %160 {strides = array<i32>} : memref<2x16x32xbf16, #tpu.memory_space<vmem>>, vector<1x16x8xbf16>,
    %161 = vector.extract_strided_slice %41 {offsets = [1, 0, 8], sizes = [1, 16, 8], strides = [1, 1, 1]} : vector<2x16x32xbf16> to vector<1x16x8xbf16>
    %162 = vector.shape_cast %161 : vector<1x16x8xbf16> to vector<16x8xbf16>
    %163 = vector.extract_strided_slice %43 {offsets = [1, 0, 8], sizes = [1, 16, 8], strides = [1, 1, 1]} : vector<2x16x32xbf16> to vector<1x16x8xbf16>
    %164 = vector.shape_cast %163 : vector<1x16x8xbf16> to vector<16x8xbf16>
    %165 = vector.extract_strided_slice %45 {offsets = [1, 0, 8], sizes = [1, 16, 8], strides = [1, 1, 1]} : vector<2x16x32xbf16> to vector<1x16x8xbf16>
    %166 = vector.shape_cast %165 : vector<1x16x8xbf16> to vector<16x8xbf16>
    %cst_51 = arith.constant dense<0.000000e+00> : vector<16x16xf32>
    %167 = tpu.matmul %162, %164, %cst_51 {dimension_numbers = #tpu.dot_dimension_numbers<[1], [1], [0], [0], [0, 0, 1, 0], [], []>} : vector<16x8xbf16>, vector<16x8xbf16>, vector<16x16xf32> -> vector<16x16xf32>
    %cst_52 = arith.constant dense<0xFF800000> : vector<16xf32>
    %168 = vector.multi_reduction <maximumf>, %167, %cst_52 [1] : vector<16x16xf32> to vector<16xf32>
    %169 = vector.shape_cast %168 : vector<16xf32> to vector<16x1xf32>
    %170 = vector.broadcast %169 : vector<16x1xf32> to vector<16x16xf32>
    %171 = arith.subf %167, %170 : vector<16x16xf32>
    %172 = math.exp %171 : vector<16x16xf32>
    %cst_53 = arith.constant dense<0.000000e+00> : vector<16xf32>
    %173 = vector.multi_reduction <add>, %172, %cst_53 [1] : vector<16x16xf32> to vector<16xf32>
    %174 = vector.shape_cast %173 : vector<16xf32> to vector<16x1xf32>
    %175 = tpu.reciprocal %174 {approx = true} : vector<16x1xf32> -> vector<16x1xf32>
    %176 = vector.broadcast %175 : vector<16x1xf32> to vector<16x16xf32>
    %177 = arith.mulf %172, %176 : vector<16x16xf32>
    %178 = arith.truncf %177 : vector<16x16xf32> to vector<16x16xbf16>
    %cst_54 = arith.constant dense<0.000000e+00> : vector<16x8xf32>
    %179 = tpu.matmul %178, %166, %cst_54 {dimension_numbers = #tpu.dot_dimension_numbers<[1], [0], [0], [1], [0, 0, 1, 1], [], []>} : vector<16x16xbf16>, vector<16x8xbf16>, vector<16x8xf32> -> vector<16x8xf32>
    %180 = arith.truncf %179 : vector<16x8xf32> to vector<16x8xbf16>
    %c1_55 = arith.constant 1 : index
    %c0_56 = arith.constant 0 : index
    %c8_57 = arith.constant 8 : index
    %181 = vector.load %arg22[%c1_55, %c0_56, %c8_57] : memref<2x16x32xbf16, #tpu.memory_space<vmem>>, vector<1x16x8xbf16>
    %182 = vector.shape_cast %181 : vector<1x16x8xbf16> to vector<16x8xbf16>
    %183 = vector.shape_cast %180 : vector<16x8xbf16> to vector<1x16x8xbf16>
    tpu.vector_store %arg22[%c1_55, %c0_56, %c8_57], %183 {strides = array<i32>} : memref<2x16x32xbf16, #tpu.memory_space<vmem>>, vector<1x16x8xbf16>,
    %184 = vector.extract_strided_slice %41 {offsets = [1, 0, 16], sizes = [1, 16, 8], strides = [1, 1, 1]} : vector<2x16x32xbf16> to vector<1x16x8xbf16>
    %185 = vector.shape_cast %184 : vector<1x16x8xbf16> to vector<16x8xbf16>
    %186 = vector.extract_strided_slice %43 {offsets = [1, 0, 16], sizes = [1, 16, 8], strides = [1, 1, 1]} : vector<2x16x32xbf16> to vector<1x16x8xbf16>
    %187 = vector.shape_cast %186 : vector<1x16x8xbf16> to vector<16x8xbf16>
    %188 = vector.extract_strided_slice %45 {offsets = [1, 0, 16], sizes = [1, 16, 8], strides = [1, 1, 1]} : vector<2x16x32xbf16> to vector<1x16x8xbf16>
    %189 = vector.shape_cast %188 : vector<1x16x8xbf16> to vector<16x8xbf16>
    %cst_58 = arith.constant dense<0.000000e+00> : vector<16x16xf32>
    %190 = tpu.matmul %185, %187, %cst_58 {dimension_numbers = #tpu.dot_dimension_numbers<[1], [1], [0], [0], [0, 0, 1, 0], [], []>} : vector<16x8xbf16>, vector<16x8xbf16>, vector<16x16xf32> -> vector<16x16xf32>
    %cst_59 = arith.constant dense<0xFF800000> : vector<16xf32>
    %191 = vector.multi_reduction <maximumf>, %190, %cst_59 [1] : vector<16x16xf32> to vector<16xf32>
    %192 = vector.shape_cast %191 : vector<16xf32> to vector<16x1xf32>
    %193 = vector.broadcast %192 : vector<16x1xf32> to vector<16x16xf32>
    %194 = arith.subf %190, %193 : vector<16x16xf32>
    %195 = math.exp %194 : vector<16x16xf32>
    %cst_60 = arith.constant dense<0.000000e+00> : vector<16xf32>
    %196 = vector.multi_reduction <add>, %195, %cst_60 [1] : vector<16x16xf32> to vector<16xf32>
    %197 = vector.shape_cast %196 : vector<16xf32> to vector<16x1xf32>
    %198 = tpu.reciprocal %197 {approx = true} : vector<16x1xf32> -> vector<16x1xf32>
    %199 = vector.broadcast %198 : vector<16x1xf32> to vector<16x16xf32>
    %200 = arith.mulf %195, %199 : vector<16x16xf32>
    %201 = arith.truncf %200 : vector<16x16xf32> to vector<16x16xbf16>
    %cst_61 = arith.constant dense<0.000000e+00> : vector<16x8xf32>
    %202 = tpu.matmul %201, %189, %cst_61 {dimension_numbers = #tpu.dot_dimension_numbers<[1], [0], [0], [1], [0, 0, 1, 1], [], []>} : vector<16x16xbf16>, vector<16x8xbf16>, vector<16x8xf32> -> vector<16x8xf32>
    %203 = arith.truncf %202 : vector<16x8xf32> to vector<16x8xbf16>
    %c1_62 = arith.constant 1 : index
    %c0_63 = arith.constant 0 : index
    %c16_64 = arith.constant 16 : index
    %204 = vector.load %arg22[%c1_62, %c0_63, %c16_64] : memref<2x16x32xbf16, #tpu.memory_space<vmem>>, vector<1x16x8xbf16>
    %205 = vector.shape_cast %204 : vector<1x16x8xbf16> to vector<16x8xbf16>
    %206 = vector.shape_cast %203 : vector<16x8xbf16> to vector<1x16x8xbf16>
    tpu.vector_store %arg22[%c1_62, %c0_63, %c16_64], %206 {strides = array<i32>} : memref<2x16x32xbf16, #tpu.memory_space<vmem>>, vector<1x16x8xbf16>,
    %207 = vector.extract_strided_slice %41 {offsets = [1, 0, 24], sizes = [1, 16, 8], strides = [1, 1, 1]} : vector<2x16x32xbf16> to vector<1x16x8xbf16>
    %208 = vector.shape_cast %207 : vector<1x16x8xbf16> to vector<16x8xbf16>
    %209 = vector.extract_strided_slice %43 {offsets = [1, 0, 24], sizes = [1, 16, 8], strides = [1, 1, 1]} : vector<2x16x32xbf16> to vector<1x16x8xbf16>
    %210 = vector.shape_cast %209 : vector<1x16x8xbf16> to vector<16x8xbf16>
    %211 = vector.extract_strided_slice %45 {offsets = [1, 0, 24], sizes = [1, 16, 8], strides = [1, 1, 1]} : vector<2x16x32xbf16> to vector<1x16x8xbf16>
    %212 = vector.shape_cast %211 : vector<1x16x8xbf16> to vector<16x8xbf16>
    %cst_65 = arith.constant dense<0.000000e+00> : vector<16x16xf32>
    %213 = tpu.matmul %208, %210, %cst_65 {dimension_numbers = #tpu.dot_dimension_numbers<[1], [1], [0], [0], [0, 0, 1, 0], [], []>} : vector<16x8xbf16>, vector<16x8xbf16>, vector<16x16xf32> -> vector<16x16xf32>
    %cst_66 = arith.constant dense<0xFF800000> : vector<16xf32>
    %214 = vector.multi_reduction <maximumf>, %213, %cst_66 [1] : vector<16x16xf32> to vector<16xf32>
    %215 = vector.shape_cast %214 : vector<16xf32> to vector<16x1xf32>
    %216 = vector.broadcast %215 : vector<16x1xf32> to vector<16x16xf32>
    %217 = arith.subf %213, %216 : vector<16x16xf32>
    %218 = math.exp %217 : vector<16x16xf32>
    %cst_67 = arith.constant dense<0.000000e+00> : vector<16xf32>
    %219 = vector.multi_reduction <add>, %218, %cst_67 [1] : vector<16x16xf32> to vector<16xf32>
    %220 = vector.shape_cast %219 : vector<16xf32> to vector<16x1xf32>
    %221 = tpu.reciprocal %220 {approx = true} : vector<16x1xf32> -> vector<16x1xf32>
    %222 = vector.broadcast %221 : vector<16x1xf32> to vector<16x16xf32>
    %223 = arith.mulf %218, %222 : vector<16x16xf32>
    %224 = arith.truncf %223 : vector<16x16xf32> to vector<16x16xbf16>
    %cst_68 = arith.constant dense<0.000000e+00> : vector<16x8xf32>
    %225 = tpu.matmul %224, %212, %cst_68 {dimension_numbers = #tpu.dot_dimension_numbers<[1], [0], [0], [1], [0, 0, 1, 1], [], []>} : vector<16x16xbf16>, vector<16x8xbf16>, vector<16x8xf32> -> vector<16x8xf32>
    %226 = arith.truncf %225 : vector<16x8xf32> to vector<16x8xbf16>
    %c1_69 = arith.constant 1 : index
    %c0_70 = arith.constant 0 : index
    %c24_71 = arith.constant 24 : index
    %227 = vector.load %arg22[%c1_69, %c0_70, %c24_71] : memref<2x16x32xbf16, #tpu.memory_space<vmem>>, vector<1x16x8xbf16>
    %228 = vector.shape_cast %227 : vector<1x16x8xbf16> to vector<16x8xbf16>
    %229 = vector.shape_cast %226 : vector<16x8xbf16> to vector<1x16x8xbf16>
    tpu.vector_store %arg22[%c1_69, %c0_70, %c24_71], %229 {strides = array<i32>} : memref<2x16x32xbf16, #tpu.memory_space<vmem>>, vector<1x16x8xbf16>,
    %c0_72 = arith.constant 0 : index
    %c0_73 = arith.constant 0 : index
    %c0_74 = arith.constant 0 : index
    %230 = vector.load %arg22[%c0_72, %c0_73, %c0_74] : memref<2x16x32xbf16, #tpu.memory_space<vmem>>, vector<2x16x32xbf16>
    %231 = vector.shape_cast %230 : vector<2x16x32xbf16> to vector<32x32xbf16>
    %c0_75 = arith.constant 0 : index
    %c0_76 = arith.constant 0 : index
    %c0_77 = arith.constant 0 : index
    %232 = vector.load %arg10[%c0_75, %c0_76, %c0_77] : memref<1x32x32xbf16, #tpu.memory_space<vmem>>, vector<1x32x32xbf16>
    %233 = vector.shape_cast %232 : vector<1x32x32xbf16> to vector<32x32xbf16>
    %cst_78 = arith.constant dense<0.000000e+00> : vector<32x32xf32>
    %234 = tpu.matmul %231, %233, %cst_78 {dimension_numbers = #tpu.dot_dimension_numbers<[1], [0], [0], [1], [0, 0, 1, 1], [], []>} : vector<32x32xbf16>, vector<32x32xbf16>, vector<32x32xf32> -> vector<32x32xf32>
    %c0_79 = arith.constant 0 : index
    %c0_80 = arith.constant 0 : index
    %c0_81 = arith.constant 0 : index
    %235 = vector.load %arg11[%c0_79, %c0_80, %c0_81] : memref<1x1x32xf32, #tpu.memory_space<vmem>>, vector<1x1x32xf32>
    %236 = vector.shape_cast %235 : vector<1x1x32xf32> to vector<1x32xf32>
    %237 = vector.broadcast %236 : vector<1x32xf32> to vector<32x32xf32>
    %238 = arith.addf %234, %237 : vector<32x32xf32>
    %239 = arith.addf %4, %238 : vector<32x32xf32>
    %c0_82 = arith.constant 0 : index
    %c0_83 = arith.constant 0 : index
    %c0_84 = arith.constant 0 : index
    %240 = vector.load %arg12[%c0_82, %c0_83, %c0_84] : memref<1x1x32xf32, #tpu.memory_space<vmem>>, vector<1x1x32xf32>
    %241 = vector.shape_cast %240 : vector<1x1x32xf32> to vector<1x32xf32>
    %c0_85 = arith.constant 0 : index
    %c0_86 = arith.constant 0 : index
    %c0_87 = arith.constant 0 : index
    %242 = vector.load %arg13[%c0_85, %c0_86, %c0_87] : memref<1x1x32xf32, #tpu.memory_space<vmem>>, vector<1x1x32xf32>
    %243 = vector.shape_cast %242 : vector<1x1x32xf32> to vector<1x32xf32>
    %cst_88 = arith.constant dense<0.000000e+00> : vector<32xf32>
    %244 = vector.multi_reduction <add>, %239, %cst_88 [1] : vector<32x32xf32> to vector<32xf32>
    %245 = vector.shape_cast %244 : vector<32xf32> to vector<32x1xf32>
    %cst_89 = arith.constant 3.200000e+01 : f32
    %246 = vector.broadcast %cst_89 : f32 to vector<32x1xf32>
    %247 = arith.divf %245, %246 : vector<32x1xf32>
    %248 = vector.broadcast %247 : vector<32x1xf32> to vector<32x32xf32>
    %249 = arith.subf %239, %248 : vector<32x32xf32>
    %250 = arith.mulf %249, %249 : vector<32x32xf32>
    %cst_90 = arith.constant dense<0.000000e+00> : vector<32xf32>
    %251 = vector.multi_reduction <add>, %250, %cst_90 [1] : vector<32x32xf32> to vector<32xf32>
    %252 = vector.shape_cast %251 : vector<32xf32> to vector<32x1xf32>
    %cst_91 = arith.constant 3.200000e+01 : f32
    %253 = vector.broadcast %cst_91 : f32 to vector<32x1xf32>
    %254 = arith.divf %252, %253 : vector<32x1xf32>
    %255 = vector.broadcast %247 : vector<32x1xf32> to vector<32x32xf32>
    %256 = arith.subf %239, %255 : vector<32x32xf32>
    %cst_92 = arith.constant 9.99999997E-7 : f32
    %257 = vector.broadcast %cst_92 : f32 to vector<32x1xf32>
    %258 = arith.addf %254, %257 : vector<32x1xf32>
    %259 = math.rsqrt %258 : vector<32x1xf32>
    %260 = vector.broadcast %259 : vector<32x1xf32> to vector<32x32xf32>
    %261 = arith.mulf %256, %260 : vector<32x32xf32>
    %262 = vector.broadcast %241 : vector<1x32xf32> to vector<32x32xf32>
    %263 = arith.mulf %261, %262 : vector<32x32xf32>
    %264 = vector.broadcast %243 : vector<1x32xf32> to vector<32x32xf32>
    %265 = arith.addf %263, %264 : vector<32x32xf32>
    %266 = arith.truncf %265 : vector<32x32xf32> to vector<32x32xbf16>
    %c0_93 = arith.constant 0 : index
    %c0_94 = arith.constant 0 : index
    %c0_95 = arith.constant 0 : index
    %267 = vector.load %arg14[%c0_93, %c0_94, %c0_95] : memref<1x32x64xbf16, #tpu.memory_space<vmem>>, vector<1x32x64xbf16>
    %268 = vector.shape_cast %267 : vector<1x32x64xbf16> to vector<32x64xbf16>
    %cst_96 = arith.constant dense<0.000000e+00> : vector<32x64xf32>
    %269 = tpu.matmul %266, %268, %cst_96 {dimension_numbers = #tpu.dot_dimension_numbers<[1], [0], [0], [1], [0, 0, 1, 1], [], []>} : vector<32x32xbf16>, vector<32x64xbf16>, vector<32x64xf32> -> vector<32x64xf32>
    %c0_97 = arith.constant 0 : index
    %c0_98 = arith.constant 0 : index
    %c0_99 = arith.constant 0 : index
    %270 = vector.load %arg15[%c0_97, %c0_98, %c0_99] : memref<1x1x64xf32, #tpu.memory_space<vmem>>, vector<1x1x64xf32>
    %271 = vector.shape_cast %270 : vector<1x1x64xf32> to vector<1x64xf32>
    %272 = vector.broadcast %271 : vector<1x64xf32> to vector<32x64xf32>
    %273 = arith.addf %269, %272 : vector<32x64xf32>
    %cst_100 = arith.constant 0.636619746 : f32
    %274 = math.sqrt %cst_100 : f32
    %cst_101 = arith.constant 5.000000e-01 : f32
    %275 = vector.broadcast %cst_101 : f32 to vector<32x64xf32>
    %276 = arith.mulf %275, %273 : vector<32x64xf32>
    %cst_102 = arith.constant 4.471500e-02 : f32
    %277 = vector.broadcast %cst_102 : f32 to vector<32x64xf32>
    %278 = arith.mulf %277, %273 : vector<32x64xf32>
    %279 = arith.mulf %278, %273 : vector<32x64xf32>
    %280 = arith.mulf %279, %273 : vector<32x64xf32>
    %281 = arith.addf %273, %280 : vector<32x64xf32>
    %282 = vector.broadcast %274 : f32 to vector<32x64xf32>
    %283 = arith.mulf %282, %281 : vector<32x64xf32>
    %284 = math.tanh %283 : vector<32x64xf32>
    %cst_103 = arith.constant 1.000000e+00 : f32
    %285 = vector.broadcast %cst_103 : f32 to vector<32x64xf32>
    %286 = arith.addf %285, %284 : vector<32x64xf32>
    %287 = arith.mulf %276, %286 : vector<32x64xf32>
    %288 = arith.truncf %287 : vector<32x64xf32> to vector<32x64xbf16>
    %c0_104 = arith.constant 0 : index
    %c0_105 = arith.constant 0 : index
    %c0_106 = arith.constant 0 : index
    %289 = vector.load %arg16[%c0_104, %c0_105, %c0_106] : memref<1x64x32xbf16, #tpu.memory_space<vmem>>, vector<1x64x32xbf16>
    %290 = vector.shape_cast %289 : vector<1x64x32xbf16> to vector<64x32xbf16>
    %cst_107 = arith.constant dense<0.000000e+00> : vector<32x32xf32>
    %291 = tpu.matmul %288, %290, %cst_107 {dimension_numbers = #tpu.dot_dimension_numbers<[1], [0], [0], [1], [0, 0, 1, 1], [], []>} : vector<32x64xbf16>, vector<64x32xbf16>, vector<32x32xf32> -> vector<32x32xf32>
    %c0_108 = arith.constant 0 : index
    %c0_109 = arith.constant 0 : index
    %c0_110 = arith.constant 0 : index
    %292 = vector.load %arg17[%c0_108, %c0_109, %c0_110] : memref<1x1x32xf32, #tpu.memory_space<vmem>>, vector<1x1x32xf32>
    %293 = vector.shape_cast %292 : vector<1x1x32xf32> to vector<1x32xf32>
    %294 = vector.broadcast %293 : vector<1x32xf32> to vector<32x32xf32>
    %295 = arith.addf %291, %294 : vector<32x32xf32>
    %296 = arith.addf %239, %295 : vector<32x32xf32>
    %297 = vector.shape_cast %296 : vector<32x32xf32> to vector<2x16x32xf32>
    %c0_111 = arith.constant 0 : index
    %c0_112 = arith.constant 0 : index
    %c0_113 = arith.constant 0 : index
    %298 = vector.load %arg21[%c0_111, %c0_112, %c0_113] : memref<2x16x32xf32, #tpu.memory_space<vmem>>, vector<2x16x32xf32>
    tpu.vector_store %arg21[%c0_111, %c0_112, %c0_113], %297 {strides = array<i32>} : memref<2x16x32xf32, #tpu.memory_space<vmem>>, vector<2x16x32xf32>,
    %c1_i32 = arith.constant 1 : i32
    %299 = arith.cmpi eq, %arg1, %c1_i32 : i32
    %300 = arith.extui %299 : i1 to i32
    %c0_i32_114 = arith.constant 0 : i32
    %301 = arith.cmpi ne, %300, %c0_i32_114 : i32
    scf.if %301 {
      %c0_115 = arith.constant 0 : index
      %c0_116 = arith.constant 0 : index
      %c0_117 = arith.constant 0 : index
      %302 = vector.load %arg21[%c0_115, %c0_116, %c0_117] : memref<2x16x32xf32, #tpu.memory_space<vmem>>, vector<2x16x32xf32>
      %303 = vector.shape_cast %302 : vector<2x16x32xf32> to vector<32x32xf32>
      %c0_118 = arith.constant 0 : index
      %c0_119 = arith.constant 0 : index
      %304 = vector.load %arg18[%c0_118, %c0_119] : memref<1x32xf32, #tpu.memory_space<vmem>>, vector<1x32xf32>
      %c0_120 = arith.constant 0 : index
      %c0_121 = arith.constant 0 : index
      %305 = vector.load %arg19[%c0_120, %c0_121] : memref<1x32xf32, #tpu.memory_space<vmem>>, vector<1x32xf32>
      %cst_122 = arith.constant dense<0.000000e+00> : vector<32xf32>
      %306 = vector.multi_reduction <add>, %303, %cst_122 [1] : vector<32x32xf32> to vector<32xf32>
      %307 = vector.shape_cast %306 : vector<32xf32> to vector<32x1xf32>
      %cst_123 = arith.constant 3.200000e+01 : f32
      %308 = vector.broadcast %cst_123 : f32 to vector<32x1xf32>
      %309 = arith.divf %307, %308 : vector<32x1xf32>
      %310 = vector.broadcast %309 : vector<32x1xf32> to vector<32x32xf32>
      %311 = arith.subf %303, %310 : vector<32x32xf32>
      %312 = arith.mulf %311, %311 : vector<32x32xf32>
      %cst_124 = arith.constant dense<0.000000e+00> : vector<32xf32>
      %313 = vector.multi_reduction <add>, %312, %cst_124 [1] : vector<32x32xf32> to vector<32xf32>
      %314 = vector.shape_cast %313 : vector<32xf32> to vector<32x1xf32>
      %cst_125 = arith.constant 3.200000e+01 : f32
      %315 = vector.broadcast %cst_125 : f32 to vector<32x1xf32>
      %316 = arith.divf %314, %315 : vector<32x1xf32>
      %317 = vector.broadcast %309 : vector<32x1xf32> to vector<32x32xf32>
      %318 = arith.subf %303, %317 : vector<32x32xf32>
      %cst_126 = arith.constant 9.99999997E-7 : f32
      %319 = vector.broadcast %cst_126 : f32 to vector<32x1xf32>
      %320 = arith.addf %316, %319 : vector<32x1xf32>
      %321 = math.rsqrt %320 : vector<32x1xf32>
      %322 = vector.broadcast %321 : vector<32x1xf32> to vector<32x32xf32>
      %323 = arith.mulf %318, %322 : vector<32x32xf32>
      %324 = vector.broadcast %304 : vector<1x32xf32> to vector<32x32xf32>
      %325 = arith.mulf %323, %324 : vector<32x32xf32>
      %326 = vector.broadcast %305 : vector<1x32xf32> to vector<32x32xf32>
      %327 = arith.addf %325, %326 : vector<32x32xf32>
      %328 = vector.shape_cast %327 : vector<32x32xf32> to vector<2x16x32xf32>
      %329 = arith.truncf %328 : vector<2x16x32xf32> to vector<2x16x32xbf16>
      %c0_127 = arith.constant 0 : index
      %c0_128 = arith.constant 0 : index
      %c0_129 = arith.constant 0 : index
      %330 = vector.load %arg20[%c0_127, %c0_128, %c0_129] : memref<2x16x32xbf16, #tpu.memory_space<vmem>>, vector<2x16x32xbf16>
      tpu.vector_store %arg20[%c0_127, %c0_128, %c0_129], %329 {strides = array<i32>} : memref<2x16x32xbf16, #tpu.memory_space<vmem>>, vector<2x16x32xbf16>,
    } else {
    }
    return
  }
  func.func @transform_0(%arg0: i32, %arg1: i32) -> (i32, i32, i32) {
    %c0_i32 = arith.constant 0 : i32
    %c0_i32_0 = arith.constant 0 : i32
    %c0_i32_1 = arith.constant 0 : i32
    return %arg0, %c0_i32, %c0_i32_0 : i32, i32, i32
  }
  func.func @transform_1(%arg0: i32, %arg1: i32) -> (i32, i32) {
    %c0_i32 = arith.constant 0 : i32
    %c0_i32_0 = arith.constant 0 : i32
    %c0_i32_1 = arith.constant 0 : i32
    return %c0_i32, %c0_i32_0 : i32, i32
  }
  func.func @transform_2(%arg0: i32, %arg1: i32) -> (i32, i32) {
    %c0_i32 = arith.constant 0 : i32
    %c0_i32_0 = arith.constant 0 : i32
    %c0_i32_1 = arith.constant 0 : i32
    return %c0_i32, %c0_i32_0 : i32, i32
  }
  func.func @transform_3(%arg0: i32, %arg1: i32) -> (i32, i32) {
    %c0_i32 = arith.constant 0 : i32
    %c0_i32_0 = arith.constant 0 : i32
    %c0_i32_1 = arith.constant 0 : i32
    return %c0_i32, %c0_i32_0 : i32, i32
  }
  func.func @transform_4(%arg0: i32, %arg1: i32) -> (i32, i32, i32) {
    %c0_i32 = arith.constant 0 : i32
    %c0_i32_0 = arith.constant 0 : i32
    %c0_i32_1 = arith.constant 0 : i32
    return %arg1, %c0_i32, %c0_i32_0 : i32, i32, i32
  }
  func.func @transform_5(%arg0: i32, %arg1: i32) -> (i32, i32, i32) {
    %c0_i32 = arith.constant 0 : i32
    %c0_i32_0 = arith.constant 0 : i32
    %c0_i32_1 = arith.constant 0 : i32
    return %arg1, %c0_i32, %c0_i32_0 : i32, i32, i32
  }
  func.func @transform_6(%arg0: i32, %arg1: i32) -> (i32, i32, i32) {
    %c0_i32 = arith.constant 0 : i32
    %c0_i32_0 = arith.constant 0 : i32
    %c0_i32_1 = arith.constant 0 : i32
    return %arg1, %c0_i32, %c0_i32_0 : i32, i32, i32
  }
  func.func @transform_7(%arg0: i32, %arg1: i32) -> (i32, i32, i32) {
    %c0_i32 = arith.constant 0 : i32
    %c0_i32_0 = arith.constant 0 : i32
    %c0_i32_1 = arith.constant 0 : i32
    return %arg1, %c0_i32, %c0_i32_0 : i32, i32, i32
  }
  func.func @transform_8(%arg0: i32, %arg1: i32) -> (i32, i32, i32) {
    %c0_i32 = arith.constant 0 : i32
    %c0_i32_0 = arith.constant 0 : i32
    %c0_i32_1 = arith.constant 0 : i32
    return %arg1, %c0_i32, %c0_i32_0 : i32, i32, i32
  }
  func.func @transform_9(%arg0: i32, %arg1: i32) -> (i32, i32, i32) {
    %c0_i32 = arith.constant 0 : i32
    %c0_i32_0 = arith.constant 0 : i32
    %c0_i32_1 = arith.constant 0 : i32
    return %arg1, %c0_i32, %c0_i32_0 : i32, i32, i32
  }
  func.func @transform_10(%arg0: i32, %arg1: i32) -> (i32, i32, i32) {
    %c0_i32 = arith.constant 0 : i32
    %c0_i32_0 = arith.constant 0 : i32
    %c0_i32_1 = arith.constant 0 : i32
    return %arg1, %c0_i32, %c0_i32_0 : i32, i32, i32
  }
  func.func @transform_11(%arg0: i32, %arg1: i32) -> (i32, i32, i32) {
    %c0_i32 = arith.constant 0 : i32
    %c0_i32_0 = arith.constant 0 : i32
    %c0_i32_1 = arith.constant 0 : i32
    return %arg1, %c0_i32, %c0_i32_0 : i32, i32, i32
  }
  func.func @transform_12(%arg0: i32, %arg1: i32) -> (i32, i32, i32) {
    %c0_i32 = arith.constant 0 : i32
    %c0_i32_0 = arith.constant 0 : i32
    %c0_i32_1 = arith.constant 0 : i32
    return %arg1, %c0_i32, %c0_i32_0 : i32, i32, i32
  }
  func.func @transform_13(%arg0: i32, %arg1: i32) -> (i32, i32, i32) {
    %c0_i32 = arith.constant 0 : i32
    %c0_i32_0 = arith.constant 0 : i32
    %c0_i32_1 = arith.constant 0 : i32
    return %arg1, %c0_i32, %c0_i32_0 : i32, i32, i32
  }
  func.func @transform_14(%arg0: i32, %arg1: i32) -> (i32, i32, i32) {
    %c0_i32 = arith.constant 0 : i32
    %c0_i32_0 = arith.constant 0 : i32
    %c0_i32_1 = arith.constant 0 : i32
    return %arg1, %c0_i32, %c0_i32_0 : i32, i32, i32
  }
  func.func @transform_15(%arg0: i32, %arg1: i32) -> (i32, i32, i32) {
    %c0_i32 = arith.constant 0 : i32
    %c0_i32_0 = arith.constant 0 : i32
    %c0_i32_1 = arith.constant 0 : i32
    return %arg1, %c0_i32, %c0_i32_0 : i32, i32, i32
  }
  func.func @transform_16(%arg0: i32, %arg1: i32) -> (i32, i32) {
    %c0_i32 = arith.constant 0 : i32
    %c0_i32_0 = arith.constant 0 : i32
    %c0_i32_1 = arith.constant 0 : i32
    return %c0_i32, %c0_i32_0 : i32, i32
  }
  func.func @transform_17(%arg0: i32, %arg1: i32) -> (i32, i32) {
    %c0_i32 = arith.constant 0 : i32
    %c0_i32_0 = arith.constant 0 : i32
    %c0_i32_1 = arith.constant 0 : i32
    return %c0_i32, %c0_i32_0 : i32, i32
  }
  func.func @transform_18(%arg0: i32, %arg1: i32) -> (i32, i32, i32) {
    %c0_i32 = arith.constant 0 : i32
    %c0_i32_0 = arith.constant 0 : i32
    %c0_i32_1 = arith.constant 0 : i32
    return %arg0, %c0_i32, %c0_i32_0 : i32, i32, i32
  }
}

</mosaic_0001>

<llo_original>
// kernel: _lambda_.1
$region0: #{_lambda_.1}
  #allocation0 [shape = 'u32[]', space=smem, size = 0x4, offset = 0x4, fixed_abs, tag = 'smem constant byte address 0x4 - core index']
  #allocation1 [shape = 'u32[72,128]{1,0:T(1,128)}', space=vmem, size = 0x9000, scoped, tag = 'internal scratch']
  #allocation2 [shape = 'f32[2,16,32]{2,1,0:T(8,128)}', space=vmem, size = 0x4000, scoped, tag = 'scratch operand']
  #allocation3 [shape = 'bf16[2,16,32]{2,1,0:T(8,128)(2,1)}', space=vmem, size = 0x2000, scoped, tag = 'scratch operand']
  %s0 = inlined_call_operand.vmem [shape: f32[2,16,48], index: 0, kind: input, shape index: {}]
  %s1 = inlined_call_operand.vmem [shape: bf16[48,32], index: 1, kind: input, shape index: {}]
  %s2 = inlined_call_operand.vmem [shape: f32[1,32], index: 2, kind: input, shape index: {}]
  %s3 = inlined_call_operand.vmem [shape: f32[16,32], index: 3, kind: input, shape index: {}]
  %s4 = inlined_call_operand.vmem [shape: f32[2,1,32], index: 4, kind: input, shape index: {}]
  %s5 = inlined_call_operand.vmem [shape: f32[2,1,32], index: 5, kind: input, shape index: {}]
  %s6 = inlined_call_operand.vmem [shape: bf16[2,32,96], index: 6, kind: input, shape index: {}]
  %s7 = inlined_call_operand.vmem [shape: f32[2,1,96], index: 7, kind: input, shape index: {}]
  %s8 = inlined_call_operand.vmem [shape: bf16[2,32,32], index: 8, kind: input, shape index: {}]
  %s9 = inlined_call_operand.vmem [shape: f32[2,1,32], index: 9, kind: input, shape index: {}]
  %s10 = inlined_call_operand.vmem [shape: f32[2,1,32], index: 10, kind: input, shape index: {}]
  %s11 = inlined_call_operand.vmem [shape: f32[2,1,32], index: 11, kind: input, shape index: {}]
  %s12 = inlined_call_operand.vmem [shape: bf16[2,32,64], index: 12, kind: input, shape index: {}]
  %s13 = inlined_call_operand.vmem [shape: f32[2,1,64], index: 13, kind: input, shape index: {}]
  %s14 = inlined_call_operand.vmem [shape: bf16[2,64,32], index: 14, kind: input, shape index: {}]
  %s15 = inlined_call_operand.vmem [shape: f32[2,1,32], index: 15, kind: input, shape index: {}]
  %s16 = inlined_call_operand.vmem [shape: f32[1,32], index: 16, kind: input, shape index: {}]
  %s17 = inlined_call_operand.vmem [shape: f32[1,32], index: 17, kind: input, shape index: {}]
  %s18 = inlined_call_operand.hbm [shape: bf16[2,16,32], index: 18, kind: output, shape index: {}]
  %s19 = sld [smem:[#allocation0]]
  $region113: #{_lambda_.1} parent=0
    _
  %s21 = ssub.s32 1, %s19
  %s22 = scalar_select 0, %s21, %s19
  $region1: #{_lambda_.1} parent=0
    #allocation4 [shape = 'u8[8192]{0}', space=vmem, size = 0x2000, scoped, tag = 'output window, operand 0, single buffered']
    #allocation5 [shape = 's32[2]{0}', space=sflag, size = 0x8, scoped, tag = 'scoped memory for _lambda_.1']
    %23 = vsyncpa [#allocation5], 0
    loop: start=0, step=1, limit=4
    $region2: #{_lambda_.1} parent=1 // loop_pre_header
      _
    $region3: #{_lambda_.1} parent=1 // loop_header
      %s25 = sphi 0, %s29
      %p26 = scmp.ge.s32.totalorder %s25, 4
      %s32 = sphi 0, %s44
      %s33 = sphi 0, %s40
      %s34 = sphi 0, %s32
      %s35 = sphi 0, %s33
      %s36 = sphi 0, %s34
      %s37 = sphi 0, %s35
      %s47 = sphi 0, %s49
      %s50 = sphi 0, %s47
      %s51 = sphi 0, %s50
      %s67 = sphi 0, %s51
      %s71 = sphi 0, %s71
      %s73 = sphi 0, %s71
      %s74 = sphi 0, %s73
      %s88 = sphi 0, %s74
      %s92 = sphi 0, %s92
      %s94 = sphi 0, %s92
      %s95 = sphi 0, %s94
      %s109 = sphi 0, %s95
      %s113 = sphi 0, %s113
      %s115 = sphi 0, %s113
      %s116 = sphi 0, %s115
      %s130 = sphi 0, %s116
      %s136 = sphi 0, %s138
      %s139 = sphi 0, %s136
      %s140 = sphi 0, %s139
      %s156 = sphi 0, %s140
      %s162 = sphi 0, %s164
      %s165 = sphi 0, %s162
      %s166 = sphi 0, %s165
      %s182 = sphi 0, %s166
      %s188 = sphi 0, %s190
      %s191 = sphi 0, %s188
      %s192 = sphi 0, %s191
      %s208 = sphi 0, %s192
      %s214 = sphi 0, %s216
      %s217 = sphi 0, %s214
      %s218 = sphi 0, %s217
      %s234 = sphi 0, %s218
      %s240 = sphi 0, %s242
      %s243 = sphi 0, %s240
      %s244 = sphi 0, %s243
      %s260 = sphi 0, %s244
      %s266 = sphi 0, %s268
      %s269 = sphi 0, %s266
      %s270 = sphi 0, %s269
      %s286 = sphi 0, %s270
      %s292 = sphi 0, %s294
      %s295 = sphi 0, %s292
      %s296 = sphi 0, %s295
      %s312 = sphi 0, %s296
      %s318 = sphi 0, %s320
      %s321 = sphi 0, %s318
      %s322 = sphi 0, %s321
      %s338 = sphi 0, %s322
      %s344 = sphi 0, %s346
      %s347 = sphi 0, %s344
      %s348 = sphi 0, %s347
      %s364 = sphi 0, %s348
      %s370 = sphi 0, %s372
      %s373 = sphi 0, %s370
      %s374 = sphi 0, %s373
      %s390 = sphi 0, %s374
      %s396 = sphi 0, %s398
      %s399 = sphi 0, %s396
      %s400 = sphi 0, %s399
      %s416 = sphi 0, %s400
      %s422 = sphi 0, %s424
      %s425 = sphi 0, %s422
      %s426 = sphi 0, %s425
      %s442 = sphi 0, %s426
      %s446 = sphi 0, %s446
      %s448 = sphi 0, %s446
      %s449 = sphi 0, %s448
      %s463 = sphi 0, %s449
      %s467 = sphi 0, %s467
      %s469 = sphi 0, %s467
      %s470 = sphi 0, %s469
      %s484 = sphi 0, %s470
      %s490 = sphi 0, %s492
      %s493 = sphi 0, %s490
      %s494 = sphi 0, %s493
      %s510 = sphi 0, %s494
    $region4: #{_lambda_.1} parent=1 // loop_header_branch
      %28 = sbr.rel (%p26) target = $region8
    $region5: #{_lambda_.1} parent=1 // loop_body
      %s30 = ssub.s32 %s25, 1
      %s31 = ssub.s32 %s25, 2
      %s38 = sadd.s32 1, %s33
      %p39 = scmp.ge.s32.totalorder %s38, 2
      %s40 = scalar_select %p39, 0, %s38
      %s41 = sadd.s32 1, %s32
      %s42 = scalar_select %p39, %s41, %s32
      %p43 = scmp.ge.s32.totalorder %s42, 1
      %s44 = scalar_select %p43, 0, %s42
      %s45 = ssub.s32 %s32, %s44
      %p46 = scmp.eq.s32.totalorder %s45, 0
      %s48 = sadd.s32 %s47, 1
      %s49 = scalar_select %p46, %s47, %s48
      %p52 = pneg %p46
      %p53 = scmp.eq.s32.totalorder %s25, 1
      %p54 = por %p52, %p53
      %p55 = scmp.ne.s32.totalorder %s47, %s50
      %p56 = scmp.eq.s32.totalorder %s25, 0
      %p57 = por %p55, %p56
      %p58 = scmp.ne.s32.totalorder %s47, %s50
      %p59 = scmp.eq.s32.totalorder %s30, 1
      %p60 = por %p58, %p59
      %p61 = scmp.ne.s32.totalorder %s50, %s51
      %p62 = scmp.eq.s32.totalorder %s30, 0
      %p63 = por %p61, %p62
      %p64 = scmp.ne.s32.totalorder %s50, %s51
      %p65 = scmp.eq.s32.totalorder %s31, 1
      %p66 = por %p64, %p65
      %p68 = scmp.ne.s32.totalorder %s51, %s67
      %p69 = scmp.eq.s32.totalorder %s31, 0
      %p70 = por %p68, %p69
      %s72 = sadd.s32 %s71, 1
      %p75 = scmp.eq.s32.totalorder %s25, 1
      %p76 = scmp.ne.s32.totalorder %s71, %s73
      %p77 = scmp.eq.s32.totalorder %s25, 0
      %p78 = por %p76, %p77
      %p79 = scmp.ne.s32.totalorder %s71, %s73
      %p80 = scmp.eq.s32.totalorder %s30, 1
      %p81 = por %p79, %p80
      %p82 = scmp.ne.s32.totalorder %s73, %s74
      %p83 = scmp.eq.s32.totalorder %s30, 0
      %p84 = por %p82, %p83
      %p85 = scmp.ne.s32.totalorder %s73, %s74
      %p86 = scmp.eq.s32.totalorder %s31, 1
      %p87 = por %p85, %p86
      %p89 = scmp.ne.s32.totalorder %s74, %s88
      %p90 = scmp.eq.s32.totalorder %s31, 0
      %p91 = por %p89, %p90
      %s93 = sadd.s32 %s92, 1
      %p96 = scmp.eq.s32.totalorder %s25, 1
      %p97 = scmp.ne.s32.totalorder %s92, %s94
      %p98 = scmp.eq.s32.totalorder %s25, 0
      %p99 = por %p97, %p98
      %p100 = scmp.ne.s32.totalorder %s92, %s94
      %p101 = scmp.eq.s32.totalorder %s30, 1
      %p102 = por %p100, %p101
      %p103 = scmp.ne.s32.totalorder %s94, %s95
      %p104 = scmp.eq.s32.totalorder %s30, 0
      %p105 = por %p103, %p104
      %p106 = scmp.ne.s32.totalorder %s94, %s95
      %p107 = scmp.eq.s32.totalorder %s31, 1
      %p108 = por %p106, %p107
      %p110 = scmp.ne.s32.totalorder %s95, %s109
      %p111 = scmp.eq.s32.totalorder %s31, 0
      %p112 = por %p110, %p111
      %s114 = sadd.s32 %s113, 1
      %p117 = scmp.eq.s32.totalorder %s25, 1
      %p118 = scmp.ne.s32.totalorder %s113, %s115
      %p119 = scmp.eq.s32.totalorder %s25, 0
      %p120 = por %p118, %p119
      %p121 = scmp.ne.s32.totalorder %s113, %s115
      %p122 = scmp.eq.s32.totalorder %s30, 1
      %p123 = por %p121, %p122
      %p124 = scmp.ne.s32.totalorder %s115, %s116
      %p125 = scmp.eq.s32.totalorder %s30, 0
      %p126 = por %p124, %p125
      %p127 = scmp.ne.s32.totalorder %s115, %s116
      %p128 = scmp.eq.s32.totalorder %s31, 1
      %p129 = por %p127, %p128
      %p131 = scmp.ne.s32.totalorder %s116, %s130
      %p132 = scmp.eq.s32.totalorder %s31, 0
      %p133 = por %p131, %p132
      %s134 = ssub.s32 %s33, %s40
      %p135 = scmp.eq.s32.totalorder %s134, 0
      %s137 = sadd.s32 %s136, 1
      %s138 = scalar_select %p135, %s136, %s137
      %p141 = pneg %p135
      %p142 = scmp.eq.s32.totalorder %s25, 1
      %p143 = por %p141, %p142
      %p144 = scmp.ne.s32.totalorder %s136, %s139
      %p145 = scmp.eq.s32.totalorder %s25, 0
      %p146 = por %p144, %p145
      %p147 = scmp.ne.s32.totalorder %s136, %s139
      %p148 = scmp.eq.s32.totalorder %s30, 1
      %p149 = por %p147, %p148
      %p150 = scmp.ne.s32.totalorder %s139, %s140
      %p151 = scmp.eq.s32.totalorder %s30, 0
      %p152 = por %p150, %p151
      %p153 = scmp.ne.s32.totalorder %s139, %s140
      %p154 = scmp.eq.s32.totalorder %s31, 1
      %p155 = por %p153, %p154
      %p157 = scmp.ne.s32.totalorder %s140, %s156
      %p158 = scmp.eq.s32.totalorder %s31, 0
      %p159 = por %p157, %p158
      %s160 = ssub.s32 %s33, %s40
      %p161 = scmp.eq.s32.totalorder %s160, 0
      %s163 = sadd.s32 %s162, 1
      %s164 = scalar_select %p161, %s162, %s163
      %p167 = pneg %p161
      %p168 = scmp.eq.s32.totalorder %s25, 1
      %p169 = por %p167, %p168
      %p170 = scmp.ne.s32.totalorder %s162, %s165
      %p171 = scmp.eq.s32.totalorder %s25, 0
      %p172 = por %p170, %p171
      %p173 = scmp.ne.s32.totalorder %s162, %s165
      %p174 = scmp.eq.s32.totalorder %s30, 1
      %p175 = por %p173, %p174
      %p176 = scmp.ne.s32.totalorder %s165, %s166
      %p177 = scmp.eq.s32.totalorder %s30, 0
      %p178 = por %p176, %p177
      %p179 = scmp.ne.s32.totalorder %s165, %s166
      %p180 = scmp.eq.s32.totalorder %s31, 1
      %p181 = por %p179, %p180
      %p183 = scmp.ne.s32.totalorder %s166, %s182
      %p184 = scmp.eq.s32.totalorder %s31, 0
      %p185 = por %p183, %p184
      %s186 = ssub.s32 %s33, %s40
      %p187 = scmp.eq.s32.totalorder %s186, 0
      %s189 = sadd.s32 %s188, 1
      %s190 = scalar_select %p187, %s188, %s189
      %p193 = pneg %p187
      %p194 = scmp.eq.s32.totalorder %s25, 1
      %p195 = por %p193, %p194
      %p196 = scmp.ne.s32.totalorder %s188, %s191
      %p197 = scmp.eq.s32.totalorder %s25, 0
      %p198 = por %p196, %p197
      %p199 = scmp.ne.s32.totalorder %s188, %s191
      %p200 = scmp.eq.s32.totalorder %s30, 1
      %p201 = por %p199, %p200
      %p202 = scmp.ne.s32.totalorder %s191, %s192
      %p203 = scmp.eq.s32.totalorder %s30, 0
      %p204 = por %p202, %p203
      %p205 = scmp.ne.s32.totalorder %s191, %s192
      %p206 = scmp.eq.s32.totalorder %s31, 1
      %p207 = por %p205, %p206
      %p209 = scmp.ne.s32.totalorder %s192, %s208
      %p210 = scmp.eq.s32.totalorder %s31, 0
      %p211 = por %p209, %p210
      %s212 = ssub.s32 %s33, %s40
      %p213 = scmp.eq.s32.totalorder %s212, 0
      %s215 = sadd.s32 %s214, 1
      %s216 = scalar_select %p213, %s214, %s215
      %p219 = pneg %p213
      %p220 = scmp.eq.s32.totalorder %s25, 1
      %p221 = por %p219, %p220
      %p222 = scmp.ne.s32.totalorder %s214, %s217
      %p223 = scmp.eq.s32.totalorder %s25, 0
      %p224 = por %p222, %p223
      %p225 = scmp.ne.s32.totalorder %s214, %s217
      %p226 = scmp.eq.s32.totalorder %s30, 1
      %p227 = por %p225, %p226
      %p228 = scmp.ne.s32.totalorder %s217, %s218
      %p229 = scmp.eq.s32.totalorder %s30, 0
      %p230 = por %p228, %p229
      %p231 = scmp.ne.s32.totalorder %s217, %s218
      %p232 = scmp.eq.s32.totalorder %s31, 1
      %p233 = por %p231, %p232
      %p235 = scmp.ne.s32.totalorder %s218, %s234
      %p236 = scmp.eq.s32.totalorder %s31, 0
      %p237 = por %p235, %p236
      %s238 = ssub.s32 %s33, %s40
      %p239 = scmp.eq.s32.totalorder %s238, 0
      %s241 = sadd.s32 %s240, 1
      %s242 = scalar_select %p239, %s240, %s241
      %p245 = pneg %p239
      %p246 = scmp.eq.s32.totalorder %s25, 1
      %p247 = por %p245, %p246
      %p248 = scmp.ne.s32.totalorder %s240, %s243
      %p249 = scmp.eq.s32.totalorder %s25, 0
      %p250 = por %p248, %p249
      %p251 = scmp.ne.s32.totalorder %s240, %s243
      %p252 = scmp.eq.s32.totalorder %s30, 1
      %p253 = por %p251, %p252
      %p254 = scmp.ne.s32.totalorder %s243, %s244
      %p255 = scmp.eq.s32.totalorder %s30, 0
      %p256 = por %p254, %p255
      %p257 = scmp.ne.s32.totalorder %s243, %s244
      %p258 = scmp.eq.s32.totalorder %s31, 1
      %p259 = por %p257, %p258
      %p261 = scmp.ne.s32.totalorder %s244, %s260
      %p262 = scmp.eq.s32.totalorder %s31, 0
      %p263 = por %p261, %p262
      %s264 = ssub.s32 %s33, %s40
      %p265 = scmp.eq.s32.totalorder %s264, 0
      %s267 = sadd.s32 %s266, 1
      %s268 = scalar_select %p265, %s266, %s267
      %p271 = pneg %p265
      %p272 = scmp.eq.s32.totalorder %s25, 1
      %p273 = por %p271, %p272
      %p274 = scmp.ne.s32.totalorder %s266, %s269
      %p275 = scmp.eq.s32.totalorder %s25, 0
      %p276 = por %p274, %p275
      %p277 = scmp.ne.s32.totalorder %s266, %s269
      %p278 = scmp.eq.s32.totalorder %s30, 1
      %p279 = por %p277, %p278
      %p280 = scmp.ne.s32.totalorder %s269, %s270
      %p281 = scmp.eq.s32.totalorder %s30, 0
      %p282 = por %p280, %p281
      %p283 = scmp.ne.s32.totalorder %s269, %s270
      %p284 = scmp.eq.s32.totalorder %s31, 1
      %p285 = por %p283, %p284
      %p287 = scmp.ne.s32.totalorder %s270, %s286
      %p288 = scmp.eq.s32.totalorder %s31, 0
      %p289 = por %p287, %p288
      %s290 = ssub.s32 %s33, %s40
      %p291 = scmp.eq.s32.totalorder %s290, 0
      %s293 = sadd.s32 %s292, 1
      %s294 = scalar_select %p291, %s292, %s293
      %p297 = pneg %p291
      %p298 = scmp.eq.s32.totalorder %s25, 1
      %p299 = por %p297, %p298
      %p300 = scmp.ne.s32.totalorder %s292, %s295
      %p301 = scmp.eq.s32.totalorder %s25, 0
      %p302 = por %p300, %p301
      %p303 = scmp.ne.s32.totalorder %s292, %s295
      %p304 = scmp.eq.s32.totalorder %s30, 1
      %p305 = por %p303, %p304
      %p306 = scmp.ne.s32.totalorder %s295, %s296
      %p307 = scmp.eq.s32.totalorder %s30, 0
      %p308 = por %p306, %p307
      %p309 = scmp.ne.s32.totalorder %s295, %s296
      %p310 = scmp.eq.s32.totalorder %s31, 1
      %p311 = por %p309, %p310
      %p313 = scmp.ne.s32.totalorder %s296, %s312
      %p314 = scmp.eq.s32.totalorder %s31, 0
      %p315 = por %p313, %p314
      %s316 = ssub.s32 %s33, %s40
      %p317 = scmp.eq.s32.totalorder %s316, 0
      %s319 = sadd.s32 %s318, 1
      %s320 = scalar_select %p317, %s318, %s319
      %p323 = pneg %p317
      %p324 = scmp.eq.s32.totalorder %s25, 1
      %p325 = por %p323, %p324
      %p326 = scmp.ne.s32.totalorder %s318, %s321
      %p327 = scmp.eq.s32.totalorder %s25, 0
      %p328 = por %p326, %p327
      %p329 = scmp.ne.s32.totalorder %s318, %s321
      %p330 = scmp.eq.s32.totalorder %s30, 1
      %p331 = por %p329, %p330
      %p332 = scmp.ne.s32.totalorder %s321, %s322
      %p333 = scmp.eq.s32.totalorder %s30, 0
      %p334 = por %p332, %p333
      %p335 = scmp.ne.s32.totalorder %s321, %s322
      %p336 = scmp.eq.s32.totalorder %s31, 1
      %p337 = por %p335, %p336
      %p339 = scmp.ne.s32.totalorder %s322, %s338
      %p340 = scmp.eq.s32.totalorder %s31, 0
      %p341 = por %p339, %p340
      %s342 = ssub.s32 %s33, %s40
      %p343 = scmp.eq.s32.totalorder %s342, 0
      %s345 = sadd.s32 %s344, 1
      %s346 = scalar_select %p343, %s344, %s345
      %p349 = pneg %p343
      %p350 = scmp.eq.s32.totalorder %s25, 1
      %p351 = por %p349, %p350
      %p352 = scmp.ne.s32.totalorder %s344, %s347
      %p353 = scmp.eq.s32.totalorder %s25, 0
      %p354 = por %p352, %p353
      %p355 = scmp.ne.s32.totalorder %s344, %s347
      %p356 = scmp.eq.s32.totalorder %s30, 1
      %p357 = por %p355, %p356
      %p358 = scmp.ne.s32.totalorder %s347, %s348
      %p359 = scmp.eq.s32.totalorder %s30, 0
      %p360 = por %p358, %p359
      %p361 = scmp.ne.s32.totalorder %s347, %s348
      %p362 = scmp.eq.s32.totalorder %s31, 1
      %p363 = por %p361, %p362
      %p365 = scmp.ne.s32.totalorder %s348, %s364
      %p366 = scmp.eq.s32.totalorder %s31, 0
      %p367 = por %p365, %p366
      %s368 = ssub.s32 %s33, %s40
      %p369 = scmp.eq.s32.totalorder %s368, 0
      %s371 = sadd.s32 %s370, 1
      %s372 = scalar_select %p369, %s370, %s371
      %p375 = pneg %p369
      %p376 = scmp.eq.s32.totalorder %s25, 1
      %p377 = por %p375, %p376
      %p378 = scmp.ne.s32.totalorder %s370, %s373
      %p379 = scmp.eq.s32.totalorder %s25, 0
      %p380 = por %p378, %p379
      %p381 = scmp.ne.s32.totalorder %s370, %s373
      %p382 = scmp.eq.s32.totalorder %s30, 1
      %p383 = por %p381, %p382
      %p384 = scmp.ne.s32.totalorder %s373, %s374
      %p385 = scmp.eq.s32.totalorder %s30, 0
      %p386 = por %p384, %p385
      %p387 = scmp.ne.s32.totalorder %s373, %s374
      %p388 = scmp.eq.s32.totalorder %s31, 1
      %p389 = por %p387, %p388
      %p391 = scmp.ne.s32.totalorder %s374, %s390
      %p392 = scmp.eq.s32.totalorder %s31, 0
      %p393 = por %p391, %p392
      %s394 = ssub.s32 %s33, %s40
      %p395 = scmp.eq.s32.totalorder %s394, 0
      %s397 = sadd.s32 %s396, 1
      %s398 = scalar_select %p395, %s396, %s397
      %p401 = pneg %p395
      %p402 = scmp.eq.s32.totalorder %s25, 1
      %p403 = por %p401, %p402
      %p404 = scmp.ne.s32.totalorder %s396, %s399
      %p405 = scmp.eq.s32.totalorder %s25, 0
      %p406 = por %p404, %p405
      %p407 = scmp.ne.s32.totalorder %s396, %s399
      %p408 = scmp.eq.s32.totalorder %s30, 1
      %p409 = por %p407, %p408
      %p410 = scmp.ne.s32.totalorder %s399, %s400
      %p411 = scmp.eq.s32.totalorder %s30, 0
      %p412 = por %p410, %p411
      %p413 = scmp.ne.s32.totalorder %s399, %s400
      %p414 = scmp.eq.s32.totalorder %s31, 1
      %p415 = por %p413, %p414
      %p417 = scmp.ne.s32.totalorder %s400, %s416
      %p418 = scmp.eq.s32.totalorder %s31, 0
      %p419 = por %p417, %p418
      %s420 = ssub.s32 %s33, %s40
      %p421 = scmp.eq.s32.totalorder %s420, 0
      %s423 = sadd.s32 %s422, 1
      %s424 = scalar_select %p421, %s422, %s423
      %p427 = pneg %p421
      %p428 = scmp.eq.s32.totalorder %s25, 1
      %p429 = por %p427, %p428
      %p430 = scmp.ne.s32.totalorder %s422, %s425
      %p431 = scmp.eq.s32.totalorder %s25, 0
      %p432 = por %p430, %p431
      %p433 = scmp.ne.s32.totalorder %s422, %s425
      %p434 = scmp.eq.s32.totalorder %s30, 1
      %p435 = por %p433, %p434
      %p436 = scmp.ne.s32.totalorder %s425, %s426
      %p437 = scmp.eq.s32.totalorder %s30, 0
      %p438 = por %p436, %p437
      %p439 = scmp.ne.s32.totalorder %s425, %s426
      %p440 = scmp.eq.s32.totalorder %s31, 1
      %p441 = por %p439, %p440
      %p443 = scmp.ne.s32.totalorder %s426, %s442
      %p444 = scmp.eq.s32.totalorder %s31, 0
      %p445 = por %p443, %p444
      %s447 = sadd.s32 %s446, 1
      %p450 = scmp.eq.s32.totalorder %s25, 1
      %p451 = scmp.ne.s32.totalorder %s446, %s448
      %p452 = scmp.eq.s32.totalorder %s25, 0
      %p453 = por %p451, %p452
      %p454 = scmp.ne.s32.totalorder %s446, %s448
      %p455 = scmp.eq.s32.totalorder %s30, 1
      %p456 = por %p454, %p455
      %p457 = scmp.ne.s32.totalorder %s448, %s449
      %p458 = scmp.eq.s32.totalorder %s30, 0
      %p459 = por %p457, %p458
      %p460 = scmp.ne.s32.totalorder %s448, %s449
      %p461 = scmp.eq.s32.totalorder %s31, 1
      %p462 = por %p460, %p461
      %p464 = scmp.ne.s32.totalorder %s449, %s463
      %p465 = scmp.eq.s32.totalorder %s31, 0
      %p466 = por %p464, %p465
      %s468 = sadd.s32 %s467, 1
      %p471 = scmp.eq.s32.totalorder %s25, 1
      %p472 = scmp.ne.s32.totalorder %s467, %s469
      %p473 = scmp.eq.s32.totalorder %s25, 0
      %p474 = por %p472, %p473
      %p475 = scmp.ne.s32.totalorder %s467, %s469
      %p476 = scmp.eq.s32.totalorder %s30, 1
      %p477 = por %p475, %p476
      %p478 = scmp.ne.s32.totalorder %s469, %s470
      %p479 = scmp.eq.s32.totalorder %s30, 0
      %p480 = por %p478, %p479
      %p481 = scmp.ne.s32.totalorder %s469, %s470
      %p482 = scmp.eq.s32.totalorder %s31, 1
      %p483 = por %p481, %p482
      %p485 = scmp.ne.s32.totalorder %s470, %s484
      %p486 = scmp.eq.s32.totalorder %s31, 0
      %p487 = por %p485, %p486
      %s488 = ssub.s32 %s32, %s44
      %p489 = scmp.eq.s32.totalorder %s488, 0
      %s491 = sadd.s32 %s490, 1
      %s492 = scalar_select %p489, %s490, %s491
      %p495 = pneg %p489
      %p496 = scmp.eq.s32.totalorder %s25, 1
      %p497 = por %p495, %p496
      %p498 = scmp.ne.s32.totalorder %s490, %s493
      %p499 = scmp.eq.s32.totalorder %s25, 0
      %p500 = por %p498, %p499
      %p501 = scmp.ne.s32.totalorder %s490, %s493
      %p502 = scmp.eq.s32.totalorder %s30, 1
      %p503 = por %p501, %p502
      %p504 = scmp.ne.s32.totalorder %s493, %s494
      %p505 = scmp.eq.s32.totalorder %s30, 0
      %p506 = por %p504, %p505
      %p507 = scmp.ne.s32.totalorder %s493, %s494
      %p508 = scmp.eq.s32.totalorder %s31, 1
      %p509 = por %p507, %p508
      %p511 = scmp.ne.s32.totalorder %s494, %s510
      %p512 = scmp.eq.s32.totalorder %s31, 0
      %p513 = por %p511, %p512
      %p514 = scmp.le.s32.totalorder 1, %s25
      %p515 = scmp.lt.s32.totalorder %s25, 3
      %p516 = pnand %p514, %p515
      %p517 = pneg %p516
      // Predicated region
      $region9: #{_lambda_.1} parent=5 // pred_check
        _
      $region10: #{_lambda_.1} parent=5 // pred_check_branch
        %519 = sbr.rel (%p516) target = $region12
      $region11: #{_lambda_.1} parent=5 // pred_region
        %s520 = ssub.s32 %s25, 1
        // Predicated region
        $region13: #{_lambda_.1} parent=11 // pred_check
          %p521 = pneg %p63
        $region14: #{_lambda_.1} parent=11 // pred_check_branch
          %523 = sbr.rel (%p521) target = $region16
        $region15: #{_lambda_.1} parent=11 // pred_region
          %s524 = smul.u32 2, %s34
          %p525 = scmp.lt.s32.totalorder %s524, 1
          %s526 = scalar_select %p525, %s524, 1
          %s527 = smul.addr %s526, 2
          %s528 = smul.addr %s527, 8
          %s529 = scalar_lea.vmem %s0, %s528
          %s530 = smul.u32 2, %s34
        $region16: #{_lambda_.1} parent=11 // pred_fallthru
          _
        // Predicated region
        $region17: #{_lambda_.1} parent=11 // pred_check
          %p531 = pneg %p84
        $region18: #{_lambda_.1} parent=11 // pred_check_branch
          %533 = sbr.rel (%p531) target = $region20
        $region19: #{_lambda_.1} parent=11 // pred_region
          _
        $region20: #{_lambda_.1} parent=11 // pred_fallthru
          _
        // Predicated region
        $region21: #{_lambda_.1} parent=11 // pred_check
          %p534 = pneg %p105
        $region22: #{_lambda_.1} parent=11 // pred_check_branch
          %536 = sbr.rel (%p534) target = $region24
        $region23: #{_lambda_.1} parent=11 // pred_region
          _
        $region24: #{_lambda_.1} parent=11 // pred_fallthru
          _
        // Predicated region
        $region25: #{_lambda_.1} parent=11 // pred_check
          %p537 = pneg %p126
        $region26: #{_lambda_.1} parent=11 // pred_check_branch
          %539 = sbr.rel (%p537) target = $region28
        $region27: #{_lambda_.1} parent=11 // pred_region
          _
        $region28: #{_lambda_.1} parent=11 // pred_fallthru
          _
        // Predicated region
        $region29: #{_lambda_.1} parent=11 // pred_check
          %p540 = pneg %p459
        $region30: #{_lambda_.1} parent=11 // pred_check_branch
          %542 = sbr.rel (%p540) target = $region32
        $region31: #{_lambda_.1} parent=11 // pred_region
          _
        $region32: #{_lambda_.1} parent=11 // pred_fallthru
          _
        // Predicated region
        $region33: #{_lambda_.1} parent=11 // pred_check
          %p543 = pneg %p480
        $region34: #{_lambda_.1} parent=11 // pred_check_branch
          %545 = sbr.rel (%p543) target = $region36
        $region35: #{_lambda_.1} parent=11 // pred_region
          _
        $region36: #{_lambda_.1} parent=11 // pred_fallthru
          _
      $region12: #{_lambda_.1} parent=5 // pred_fallthru
        _
      %p546 = scmp.lt.s32.totalorder %s25, 2
      // Predicated region
      $region37: #{_lambda_.1} parent=5 // pred_check
        %p547 = pneg %p546
      $region38: #{_lambda_.1} parent=5 // pred_check_branch
        %549 = sbr.rel (%p547) target = $region40
      $region39: #{_lambda_.1} parent=5 // pred_region
        // Predicated region
        $region41: #{_lambda_.1} parent=39 // pred_check
          %p550 = pneg %p146
        $region42: #{_lambda_.1} parent=39 // pred_check_branch
          %552 = sbr.rel (%p550) target = $region44
        $region43: #{_lambda_.1} parent=39 // pred_region
          %p553 = scmp.lt.s32.totalorder %s33, 1
          %s554 = scalar_select %p553, %s33, 1
          %s555 = scalar_lea.vmem %s4, %s554
        $region44: #{_lambda_.1} parent=39 // pred_fallthru
          _
        // Predicated region
        $region45: #{_lambda_.1} parent=39 // pred_check
          %p556 = pneg %p172
        $region46: #{_lambda_.1} parent=39 // pred_check_branch
          %558 = sbr.rel (%p556) target = $region48
        $region47: #{_lambda_.1} parent=39 // pred_region
          %p559 = scmp.lt.s32.totalorder %s33, 1
          %s560 = scalar_select %p559, %s33, 1
          %s561 = scalar_lea.vmem %s5, %s560
        $region48: #{_lambda_.1} parent=39 // pred_fallthru
          _
        // Predicated region
        $region49: #{_lambda_.1} parent=39 // pred_check
          %p562 = pneg %p198
        $region50: #{_lambda_.1} parent=39 // pred_check_branch
          %564 = sbr.rel (%p562) target = $region52
        $region51: #{_lambda_.1} parent=39 // pred_region
          %p565 = scmp.lt.s32.totalorder %s33, 1
          %s566 = scalar_select %p565, %s33, 1
          %s567 = smul.addr %s566, 4
          %s568 = smul.addr %s567, 4
          %s569 = scalar_lea.vmem %s6, %s568
        $region52: #{_lambda_.1} parent=39 // pred_fallthru
          _
        // Predicated region
        $region53: #{_lambda_.1} parent=39 // pred_check
          %p570 = pneg %p224
        $region54: #{_lambda_.1} parent=39 // pred_check_branch
          %572 = sbr.rel (%p570) target = $region56
        $region55: #{_lambda_.1} parent=39 // pred_region
          %p573 = scmp.lt.s32.totalorder %s33, 1
          %s574 = scalar_select %p573, %s33, 1
          %s575 = scalar_lea.vmem %s7, %s574
        $region56: #{_lambda_.1} parent=39 // pred_fallthru
          _
        // Predicated region
        $region57: #{_lambda_.1} parent=39 // pred_check
          %p576 = pneg %p250
        $region58: #{_lambda_.1} parent=39 // pred_check_branch
          %578 = sbr.rel (%p576) target = $region60
        $region59: #{_lambda_.1} parent=39 // pred_region
          %p579 = scmp.lt.s32.totalorder %s33, 1
          %s580 = scalar_select %p579, %s33, 1
          %s581 = smul.addr %s580, 4
          %s582 = smul.addr %s581, 4
          %s583 = scalar_lea.vmem %s8, %s582
        $region60: #{_lambda_.1} parent=39 // pred_fallthru
          _
        // Predicated region
        $region61: #{_lambda_.1} parent=39 // pred_check
          %p584 = pneg %p276
        $region62: #{_lambda_.1} parent=39 // pred_check_branch
          %586 = sbr.rel (%p584) target = $region64
        $region63: #{_lambda_.1} parent=39 // pred_region
          %p587 = scmp.lt.s32.totalorder %s33, 1
          %s588 = scalar_select %p587, %s33, 1
          %s589 = scalar_lea.vmem %s9, %s588
        $region64: #{_lambda_.1} parent=39 // pred_fallthru
          _
        // Predicated region
        $region65: #{_lambda_.1} parent=39 // pred_check
          %p590 = pneg %p302
        $region66: #{_lambda_.1} parent=39 // pred_check_branch
          %592 = sbr.rel (%p590) target = $region68
        $region67: #{_lambda_.1} parent=39 // pred_region
          %p593 = scmp.lt.s32.totalorder %s33, 1
          %s594 = scalar_select %p593, %s33, 1
          %s595 = scalar_lea.vmem %s10, %s594
        $region68: #{_lambda_.1} parent=39 // pred_fallthru
          _
        // Predicated region
        $region69: #{_lambda_.1} parent=39 // pred_check
          %p596 = pneg %p328
        $region70: #{_lambda_.1} parent=39 // pred_check_branch
          %598 = sbr.rel (%p596) target = $region72
        $region71: #{_lambda_.1} parent=39 // pred_region
          %p599 = scmp.lt.s32.totalorder %s33, 1
          %s600 = scalar_select %p599, %s33, 1
          %s601 = scalar_lea.vmem %s11, %s600
        $region72: #{_lambda_.1} parent=39 // pred_fallthru
          _
        // Predicated region
        $region73: #{_lambda_.1} parent=39 // pred_check
          %p602 = pneg %p354
        $region74: #{_lambda_.1} parent=39 // pred_check_branch
          %604 = sbr.rel (%p602) target = $region76
        $region75: #{_lambda_.1} parent=39 // pred_region
          %p605 = scmp.lt.s32.totalorder %s33, 1
          %s606 = scalar_select %p605, %s33, 1
          %s607 = smul.addr %s606, 4
          %s608 = smul.addr %s607, 4
          %s609 = scalar_lea.vmem %s12, %s608
        $region76: #{_lambda_.1} parent=39 // pred_fallthru
          _
        // Predicated region
        $region77: #{_lambda_.1} parent=39 // pred_check
          %p610 = pneg %p380
        $region78: #{_lambda_.1} parent=39 // pred_check_branch
          %612 = sbr.rel (%p610) target = $region80
        $region79: #{_lambda_.1} parent=39 // pred_region
          %p613 = scmp.lt.s32.totalorder %s33, 1
          %s614 = scalar_select %p613, %s33, 1
          %s615 = scalar_lea.vmem %s13, %s614
        $region80: #{_lambda_.1} parent=39 // pred_fallthru
          _
        // Predicated region
        $region81: #{_lambda_.1} parent=39 // pred_check
          %p616 = pneg %p406
        $region82: #{_lambda_.1} parent=39 // pred_check_branch
          %618 = sbr.rel (%p616) target = $region84
        $region83: #{_lambda_.1} parent=39 // pred_region
          %p619 = scmp.lt.s32.totalorder %s33, 1
          %s620 = scalar_select %p619, %s33, 1
          %s621 = smul.addr %s620, 8
          %s622 = smul.addr %s621, 4
          %s623 = scalar_lea.vmem %s14, %s622
        $region84: #{_lambda_.1} parent=39 // pred_fallthru
          _
        // Predicated region
        $region85: #{_lambda_.1} parent=39 // pred_check
          %p624 = pneg %p432
        $region86: #{_lambda_.1} parent=39 // pred_check_branch
          %626 = sbr.rel (%p624) target = $region88
        $region87: #{_lambda_.1} parent=39 // pred_region
          %p627 = scmp.lt.s32.totalorder %s33, 1
          %s628 = scalar_select %p627, %s33, 1
          %s629 = scalar_lea.vmem %s15, %s628
        $region88: #{_lambda_.1} parent=39 // pred_fallthru
          _
      $region40: #{_lambda_.1} parent=5 // pred_fallthru
        _
      %p630 = scmp.le.s32.totalorder 1, %s25
      %p631 = scmp.lt.s32.totalorder %s25, 3
      %p632 = pnand %p630, %p631
      %p633 = pneg %p632
      // Predicated region
      $region89: #{_lambda_.1} parent=5 // pred_check
        _
      $region90: #{_lambda_.1} parent=5 // pred_check_branch
        %635 = sbr.rel (%p632) target = $region92
      $region91: #{_lambda_.1} parent=5 // pred_region
        %s636 = ssub.s32 %s25, 1
        %s637 = smul.u32 2, %s34
        %p638 = scmp.lt.s32.totalorder %s637, 1
        %s639 = scalar_select %p638, %s637, 1
        %s640 = smul.addr %s639, 2
        %s641 = smul.addr %s640, 8
        %s642 = scalar_lea.vmem %s0, %s641
        %p643 = pneg %p63
        %p644 = pneg %p60
        %p645 = pneg %p84
        %p646 = pneg %p81
        %p647 = pneg %p105
        %p648 = pneg %p102
        %p649 = pneg %p126
        %p650 = pneg %p123
        %p651 = scmp.lt.s32.totalorder %s35, 1
        %s652 = scalar_select %p651, %s35, 1
        %s653 = scalar_lea.vmem %s4, %s652
        %p654 = pneg %p152
        %p655 = pneg %p149
        %p656 = scmp.lt.s32.totalorder %s35, 1
        %s657 = scalar_select %p656, %s35, 1
        %s658 = scalar_lea.vmem %s5, %s657
        %p659 = pneg %p178
        %p660 = pneg %p175
        %p661 = scmp.lt.s32.totalorder %s35, 1
        %s662 = scalar_select %p661, %s35, 1
        %s663 = smul.addr %s662, 4
        %s664 = smul.addr %s663, 4
        %s665 = scalar_lea.vmem %s6, %s664
        %p666 = pneg %p204
        %p667 = pneg %p201
        %p668 = scmp.lt.s32.totalorder %s35, 1
        %s669 = scalar_select %p668, %s35, 1
        %s670 = scalar_lea.vmem %s7, %s669
        %p671 = pneg %p230
        %p672 = pneg %p227
        %p673 = scmp.lt.s32.totalorder %s35, 1
        %s674 = scalar_select %p673, %s35, 1
        %s675 = smul.addr %s674, 4
        %s676 = smul.addr %s675, 4
        %s677 = scalar_lea.vmem %s8, %s676
        %p678 = pneg %p256
        %p679 = pneg %p253
        %p680 = scmp.lt.s32.totalorder %s35, 1
        %s681 = scalar_select %p680, %s35, 1
        %s682 = scalar_lea.vmem %s9, %s681
        %p683 = pneg %p282
        %p684 = pneg %p279
        %p685 = scmp.lt.s32.totalorder %s35, 1
        %s686 = scalar_select %p685, %s35, 1
        %s687 = scalar_lea.vmem %s10, %s686
        %p688 = pneg %p308
        %p689 = pneg %p305
        %p690 = scmp.lt.s32.totalorder %s35, 1
        %s691 = scalar_select %p690, %s35, 1
        %s692 = scalar_lea.vmem %s11, %s691
        %p693 = pneg %p334
        %p694 = pneg %p331
        %p695 = scmp.lt.s32.totalorder %s35, 1
        %s696 = scalar_select %p695, %s35, 1
        %s697 = smul.addr %s696, 4
        %s698 = smul.addr %s697, 4
        %s699 = scalar_lea.vmem %s12, %s698
        %p700 = pneg %p360
        %p701 = pneg %p357
        %p702 = scmp.lt.s32.totalorder %s35, 1
        %s703 = scalar_select %p702, %s35, 1
        %s704 = scalar_lea.vmem %s13, %s703
        %p705 = pneg %p386
        %p706 = pneg %p383
        %p707 = scmp.lt.s32.totalorder %s35, 1
        %s708 = scalar_select %p707, %s35, 1
        %s709 = smul.addr %s708, 8
        %s710 = smul.addr %s709, 4
        %s711 = scalar_lea.vmem %s14, %s710
        %p712 = pneg %p412
        %p713 = pneg %p409
        %p714 = scmp.lt.s32.totalorder %s35, 1
        %s715 = scalar_select %p714, %s35, 1
        %s716 = scalar_lea.vmem %s15, %s715
        %p717 = pneg %p438
        %p718 = pneg %p435
        %p719 = pneg %p459
        %p720 = pneg %p456
        %p721 = pneg %p480
        %p722 = pneg %p477
        %p723 = pneg %p506
        %p724 = pneg %p503
        %s725 = smul.u32 2, %s34
        %p726 = scmp.lt.s32.totalorder %s725, 1
        %s727 = scalar_select %p726, %s725, 1
        %s728 = smul.addr %s727, 2
        %s729 = smul.addr %s728, 8
        %s730 = scalar_lea.vmem %s0, %s729
        %s731 = smul.u32 2, %s34
        %p732 = scmp.lt.s32.totalorder %s35, 1
        %s733 = scalar_select %p732, %s35, 1
        %s734 = scalar_lea.vmem %s4, %s733
        %p735 = scmp.lt.s32.totalorder %s35, 1
        %s736 = scalar_select %p735, %s35, 1
        %s737 = scalar_lea.vmem %s5, %s736
        %p738 = scmp.lt.s32.totalorder %s35, 1
        %s739 = scalar_select %p738, %s35, 1
        %s740 = smul.addr %s739, 4
        %s741 = smul.addr %s740, 4
        %s742 = scalar_lea.vmem %s6, %s741
        %p743 = scmp.lt.s32.totalorder %s35, 1
        %s744 = scalar_select %p743, %s35, 1
        %s745 = scalar_lea.vmem %s7, %s744
        %p746 = scmp.lt.s32.totalorder %s35, 1
        %s747 = scalar_select %p746, %s35, 1
        %s748 = smul.addr %s747, 4
        %s749 = smul.addr %s748, 4
        %s750 = scalar_lea.vmem %s8, %s749
        %p751 = scmp.lt.s32.totalorder %s35, 1
        %s752 = scalar_select %p751, %s35, 1
        %s753 = scalar_lea.vmem %s9, %s752
        %p754 = scmp.lt.s32.totalorder %s35, 1
        %s755 = scalar_select %p754, %s35, 1
        %s756 = scalar_lea.vmem %s10, %s755
        %p757 = scmp.lt.s32.totalorder %s35, 1
        %s758 = scalar_select %p757, %s35, 1
        %s759 = scalar_lea.vmem %s11, %s758
        %p760 = scmp.lt.s32.totalorder %s35, 1
        %s761 = scalar_select %p760, %s35, 1
        %s762 = smul.addr %s761, 4
        %s763 = smul.addr %s762, 4
        %s764 = scalar_lea.vmem %s12, %s763
        %p765 = scmp.lt.s32.totalorder %s35, 1
        %s766 = scalar_select %p765, %s35, 1
        %s767 = scalar_lea.vmem %s13, %s766
        %p768 = scmp.lt.s32.totalorder %s35, 1
        %s769 = scalar_select %p768, %s35, 1
        %s770 = smul.addr %s769, 8
        %s771 = smul.addr %s770, 4
        %s772 = scalar_lea.vmem %s14, %s771
        %p773 = scmp.lt.s32.totalorder %s35, 1
        %s774 = scalar_select %p773, %s35, 1
        %s775 = scalar_lea.vmem %s15, %s774
        %s776 = smul.u32 2, %s34
        %p778 = scmp.eq.s32.totalorder %s35, 0
        // Predicated region
        $region93: #{_lambda_.1} parent=91 // pred_check
          %p779 = pneg %p778
        $region94: #{_lambda_.1} parent=91 // pred_check_branch
          %781 = sbr.rel (%p779) target = $region96
        $region95: #{_lambda_.1} parent=91 // pred_region
          %v782 = vld [vmem:[%s730] sm:$0xff]
          %v783 = vld [vmem:[%s730 + $0x8] sm:$0xff]
          %v784 = vld [vmem:[%s730 + $0x10] sm:$0xff]
          %v785 = vld [vmem:[%s730 + $0x18] sm:$0xff]
          %v786 = vpack.c.bf16 %v782, %v782
          %v787 = vpack.c.bf16 %v783, %v783
          %v788 = vpack.c.bf16 %v784, %v784
          %v789 = vpack.c.bf16 %v785, %v785
          %v790 = vld [vmem:[%s1] sm:$0xf]
          %v791 = vld [vmem:[%s1 + $0x4] sm:$0xf]
          %v792 = vld [vmem:[%s1 + $0x8] sm:$0xf]
          %v793 = vld [vmem:[%s1 + $0xc] sm:$0xf]
          %v794 = vld [vmem:[%s1 + $0x10] sm:$0xf]
          %v795 = vld [vmem:[%s1 + $0x14] sm:$0xf]
          %v800 = vunpack.c.l.b16 %v786
          %v801 = vunpack.c.l.b16 %v787
          %v802 = vunpack.c.l.b16 %v788
          %v803 = vunpack.c.l.b16 %v789
          %v804 = vpack.c.b16 %v801, %v800
          %v805 = vpack.c.b16 %v803, %v802
          %v812 = vunpack.c.l.b16 %v790
          %v813 = vunpack.c.l.b16 %v791
          %v814 = vunpack.c.l.b16 %v792
          %v815 = vunpack.c.l.b16 %v793
          %v816 = vunpack.c.l.b16 %v794
          %v817 = vunpack.c.l.b16 %v795
          %v818 = vpack.c.b16 %v813, %v812
          %v819 = vpack.c.b16 %v815, %v814
          %v820 = vpack.c.b16 %v817, %v816
          %vm824 = vcmask 392192
          %v826 = vsel %vm824, %v804, 0
          %v829 = vsel %vm824, %v805, 0
          %831 = vmatpush.bf16.msra.mxu0 0
          %832 = vmatpush.bf16.msra.mxu0 0
          %833 = vmatpush.bf16.msra.mxu0 0
          %834 = vmatpush.bf16.msra.mxu0 0
          %835 = vmatpush.bf16.msra.mxu0 0
          %836 = vmatpush.bf16.msra.mxu0 %v820
          %837 = vmatpush.bf16.msra.mxu0 %v819
          %838 = vmatpush.bf16.msra.mxu0 %v818
          %839 = vmatmul.bf16.gmra.mxu0 %v826
          %v840 = vpop.f32.mrf.mxu0
          %v841 = vadd.f32 0.0, %v840
          %v842 = vpop.f32.mrf.mxu0
          %v843 = vadd.f32 0.0, %v842
          %844 = vmatmul.bf16.gmra.mxu0 %v829
          %v845 = vpop.f32.mrf.mxu0
          %v846 = vadd.f32 0.0, %v845
          %v847 = vpop.f32.mrf.mxu0
          %v848 = vadd.f32 0.0, %v847
          %849 = vdwg.mxu0
          %v850 = vld [vmem:[%s2] sm:$0x1]
          %v852 = vperm.slane %v850, 0
          %v854 = vadd.f32 %v841, %v852
          %v855 = vadd.f32 %v843, %v852
          %v856 = vadd.f32 %v846, %v852
          %v857 = vadd.f32 %v848, %v852
          %v858 = vld [vmem:[%s3] sm:$0xff]
          %v859 = vld [vmem:[%s3 + $0x8] sm:$0xff]
          %v860 = vadd.f32 %v854, %v858
          %v861 = vadd.f32 %v855, %v859
          %v862 = vadd.f32 %v856, %v858
          %v863 = vadd.f32 %v857, %v859
          %vm864 = vcmask 261120
          %865 = vst.msk [vmem:[#allocation2] sm:$0xff] %vm864, %v860
          %866 = vst.msk [vmem:[#allocation2 + $0x8] sm:$0xff] %vm864, %v861
          %867 = vst.msk [vmem:[#allocation2 + $0x10] sm:$0xff] %vm864, %v862
          %868 = vst.msk [vmem:[#allocation2 + $0x18] sm:$0xff] %vm864, %v863
        $region96: #{_lambda_.1} parent=91 // pred_fallthru
          _
        %v869 = vld [vmem:[#allocation2] sm:$0xff]
        %v870 = vld [vmem:[#allocation2 + $0x8] sm:$0xff]
        %v871 = vld [vmem:[#allocation2 + $0x10] sm:$0xff]
        %v872 = vld [vmem:[#allocation2 + $0x18] sm:$0xff]
        %v873 = vld [vmem:[%s734] sm:$0x1]
        %v874 = vld [vmem:[%s737] sm:$0x1]
        %vm875 = vcmask 261120
        %v876 = vsel %vm875, %v869, 0.0
        %877 = vadd.xlane.f32.xlu0 %v876
        %v878 = vpop.xlane.xlu0 %877
        %v879 = vsel %vm875, %v870, 0.0
        %880 = vadd.xlane.f32.xlu0 %v879
        %v881 = vpop.xlane.xlu0 %880
        %v882 = vsel %vm875, %v871, 0.0
        %883 = vadd.xlane.f32.xlu0 %v882
        %v884 = vpop.xlane.xlu0 %883
        %v885 = vsel %vm875, %v872, 0.0
        %886 = vadd.xlane.f32.xlu0 %v885
        %v887 = vpop.xlane.xlu0 %886
        %v888 = vrcp.pop 32.0
        %v889 = vmul.f32 32.0, %v888
        %v890 = vsub.f32 1.0, %v889
        %v891 = vmul.f32 %v888, %v890
        %v892 = vadd.f32 %v888, %v891
        %vm893 = vweird.f32 %v888
        %v894 = vsel %vm893, %v888, %v892
        %v895 = vmul.f32 %v878, %v894
        %v896 = vmul.f32 %v881, %v894
        %v897 = vmul.f32 %v884, %v894
        %v898 = vmul.f32 %v887, %v894
        %v899 = vsub.f32 %v869, %v895
        %v900 = vsub.f32 %v870, %v896
        %v901 = vsub.f32 %v871, %v897
        %v902 = vsub.f32 %v872, %v898
        %v903 = vmul.f32 %v899, %v899
        %v904 = vmul.f32 %v900, %v900
        %v905 = vmul.f32 %v901, %v901
        %v906 = vmul.f32 %v902, %v902
        %v907 = vsel %vm875, %v903, 0.0
        %908 = vadd.xlane.f32.xlu0 %v907
        %v909 = vpop.xlane.xlu0 %908
        %v910 = vsel %vm875, %v904, 0.0
        %911 = vadd.xlane.f32.xlu0 %v910
        %v912 = vpop.xlane.xlu0 %911
        %v913 = vsel %vm875, %v905, 0.0
        %914 = vadd.xlane.f32.xlu0 %v913
        %v915 = vpop.xlane.xlu0 %914
        %v916 = vsel %vm875, %v906, 0.0
        %917 = vadd.xlane.f32.xlu0 %v916
        %v918 = vpop.xlane.xlu0 %917
        %v919 = vmul.f32 %v909, %v894
        %v920 = vmul.f32 %v912, %v894
        %v921 = vmul.f32 %v915, %v894
        %v922 = vmul.f32 %v918, %v894
        %v923 = vadd.f32 %v919, 1e-06
        %v924 = vadd.f32 %v920, 1e-06
        %v925 = vadd.f32 %v921, 1e-06
        %v926 = vadd.f32 %v922, 1e-06
        %v927 = vrsqrt.pop %v923
        %v928 = vmul.f32 %v927, %v923
        %v929 = vmul.f32 %v928, %v927
        %v930 = vmul.f32 0.5, %v929
        %v931 = vsub.f32 1.5, %v930
        %v932 = vmul.f32 %v927, %v931
        %vm933 = vweird.f32 %v923
        %vm934 = vweird.f32 %v927
        %vm935 = vmor %vm933, %vm934
        %v936 = vsel %vm935, %v927, %v932
        %v937 = vrsqrt.pop %v924
        %v938 = vmul.f32 %v937, %v924
        %v939 = vmul.f32 %v938, %v937
        %v940 = vmul.f32 0.5, %v939
        %v941 = vsub.f32 1.5, %v940
        %v942 = vmul.f32 %v937, %v941
        %vm943 = vweird.f32 %v924
        %vm944 = vweird.f32 %v937
        %vm945 = vmor %vm943, %vm944
        %v946 = vsel %vm945, %v937, %v942
        %v947 = vrsqrt.pop %v925
        %v948 = vmul.f32 %v947, %v925
        %v949 = vmul.f32 %v948, %v947
        %v950 = vmul.f32 0.5, %v949
        %v951 = vsub.f32 1.5, %v950
        %v952 = vmul.f32 %v947, %v951
        %vm953 = vweird.f32 %v925
        %vm954 = vweird.f32 %v947
        %vm955 = vmor %vm953, %vm954
        %v956 = vsel %vm955, %v947, %v952
        %v957 = vrsqrt.pop %v926
        %v958 = vmul.f32 %v957, %v926
        %v959 = vmul.f32 %v958, %v957
        %v960 = vmul.f32 0.5, %v959
        %v961 = vsub.f32 1.5, %v960
        %v962 = vmul.f32 %v957, %v961
        %vm963 = vweird.f32 %v926
        %vm964 = vweird.f32 %v957
        %vm965 = vmor %vm963, %vm964
        %v966 = vsel %vm965, %v957, %v962
        %v967 = vmul.f32 %v899, %v936
        %v968 = vmul.f32 %v900, %v946
        %v969 = vmul.f32 %v901, %v956
        %v970 = vmul.f32 %v902, %v966
        %v972 = vperm.slane %v873, 0
        %v974 = vmul.f32 %v967, %v972
        %v975 = vmul.f32 %v968, %v972
        %v976 = vmul.f32 %v969, %v972
        %v977 = vmul.f32 %v970, %v972
        %v979 = vperm.slane %v874, 0
        %v981 = vadd.f32 %v974, %v979
        %v982 = vadd.f32 %v975, %v979
        %v983 = vadd.f32 %v976, %v979
        %v984 = vadd.f32 %v977, %v979
        %v985 = vpack.c.bf16 %v982, %v981
        %v986 = vpack.c.bf16 %v984, %v983
        %v987 = vld [vmem:[%s742] sm:$0xf]
        %v988 = vld [vmem:[%s742 + $0x4] sm:$0xf]
        %v989 = vld [vmem:[%s742 + $0x8] sm:$0xf]
        %v990 = vld [vmem:[%s742 + $0xc] sm:$0xf]
        %v991 = vld [vmem:[%s745] sm:$0x1]
        %v993 = vperm.slane %v991, 0
        %v999 = vunpack.c.l.b16 %v987
        %v1000 = vunpack.c.l.b16 %v988
        %v1001 = vunpack.c.l.b16 %v989
        %v1002 = vunpack.c.l.b16 %v990
        %v1003 = vpack.c.b16 %v1000, %v999
        %v1004 = vpack.c.b16 %v1002, %v1001
        %v1008 = vsel %vm875, %v985, 0
        %v1011 = vsel %vm875, %v986, 0
        %1013 = vmatpush.bf16.msra.mxu0 0
        %1014 = vmatpush.bf16.msra.mxu0 0
        %1015 = vmatpush.bf16.msra.mxu0 0
        %1016 = vmatpush.bf16.msra.mxu0 0
        %1017 = vmatpush.bf16.msra.mxu0 0
        %1018 = vmatpush.bf16.msra.mxu0 0
        %1019 = vmatpush.bf16.msra.mxu0 %v1004
        %1020 = vmatpush.bf16.msra.mxu0 %v1003
        %1021 = vmatmul.bf16.gmra.mxu0 %v1008
        %v1022 = vpop.f32.mrf.mxu0
        %v1023 = vadd.f32 %v993, %v1022
        %v1024 = vpop.f32.mrf.mxu0
        %v1025 = vadd.f32 %v993, %v1024
        %1026 = vmatmul.bf16.gmra.mxu0 %v1011
        %v1027 = vpop.f32.mrf.mxu0
        %v1028 = vadd.f32 %v993, %v1027
        %v1029 = vpop.f32.mrf.mxu0
        %v1030 = vadd.f32 %v993, %v1029
        %1031 = vdwg.mxu0
        %v1032 = vpack.c.bf16 %v1023, %v1023
        %v1033 = vpack.c.bf16 %v1025, %v1025
        %v1034 = vpack.c.bf16 %v1028, %v1028
        %v1035 = vpack.c.bf16 %v1030, %v1030
        %v1038 = vunpack.c.l.b16 %v1032
        %v1039 = vunpack.c.l.b16 %v1033
        %v1040 = vpack.c.b16 %v1039, %v1038
        %1041 = vrot.lane.b32.xlu0 %v1040, 96
        %v1042 = vpop.permute.xlu0 %1041
        %vm1043 = vcmask 64512
        %v1045 = vsel %vm1043, %v1040, 0
        %v1048 = vsel %vm1043, %v1042, 0
        %1050 = vmatpush.bf16.xpose.msra.mxu0 0
        %1051 = vmatpush.bf16.xpose.msra.mxu0 0
        %1052 = vmatpush.bf16.xpose.msra.mxu0 0
        %1053 = vmatpush.bf16.xpose.msra.mxu0 0
        %1054 = vmatpush.bf16.xpose.msra.mxu0 0
        %1055 = vmatpush.bf16.xpose.msra.mxu0 0
        %1056 = vmatpush.bf16.xpose.msra.mxu0 0
        %1057 = vmatpush.bf16.xpose.msra.mxu0 %v1048
        %1058 = vmatmul.bf16.gmra.mxu0 %v1045
        %v1059 = vpop.f32.mrf.mxu0
        %v1060 = vadd.f32 0.0, %v1059
        %v1061 = vpop.f32.mrf.mxu0
        %v1062 = vadd.f32 0.0, %v1061
        %1063 = vdwg.mxu0
        %vm1064 = vcmask 130048
        %v1065 = vsel %vm1064, %v1060, -inf
        %1066 = vmax.xlane.f32.xlu0 %v1065
        %v1067 = vpop.xlane.xlu0 %1066
        %v1068 = vsel %vm1064, %v1062, -inf
        %1069 = vmax.xlane.f32.xlu0 %v1068
        %v1070 = vpop.xlane.xlu0 %1069
        %v1071 = vsub.f32 %v1060, %v1067
        %v1072 = vsub.f32 %v1062, %v1070
        %v1073 = vmul.f32 %v1071, 1.442695
        %v1074 = vpow.pop %v1073
        %v1075 = vmul.f32 %v1072, 1.442695
        %v1076 = vpow.pop %v1075
        %v1077 = vsel %vm1064, %v1074, 0.0
        %1078 = vadd.xlane.f32.xlu0 %v1077
        %v1079 = vpop.xlane.xlu0 %1078
        %v1080 = vsel %vm1064, %v1076, 0.0
        %1081 = vadd.xlane.f32.xlu0 %v1080
        %v1082 = vpop.xlane.xlu0 %1081
        %v1083 = vrcp.pop %v1079
        %v1084 = vrcp.pop %v1082
        %v1085 = vmul.f32 %v1074, %v1083
        %v1086 = vmul.f32 %v1076, %v1084
        %v1087 = vpack.c.bf16 %v1086, %v1085
        %1088 = vrot.lane.b32.xlu0 %v1040, 64
        %v1089 = vpop.permute.xlu0 %1088
        %v1092 = vsel %vm1064, %v1087, 0
        %1094 = vmatpush.bf16.msra.mxu0 0
        %1095 = vmatpush.bf16.msra.mxu0 0
        %1096 = vmatpush.bf16.msra.mxu0 0
        %1097 = vmatpush.bf16.msra.mxu0 0
        %1098 = vmatpush.bf16.msra.mxu0 0
        %1099 = vmatpush.bf16.msra.mxu0 0
        %1100 = vmatpush.bf16.msra.mxu0 0
        %1101 = vmatpush.bf16.msra.mxu0 %v1089
        %1102 = vmatmul.bf16.gmra.mxu0 %v1092
        %v1103 = vpop.f32.mrf.mxu0
        %v1104 = vadd.f32 0.0, %v1103
        %v1105 = vpop.f32.mrf.mxu0
        %v1106 = vadd.f32 0.0, %v1105
        %1107 = vdwg.mxu0
        %v1108 = vpack.c.bf16 %v1104, %v1104
        %v1109 = vpack.c.bf16 %v1106, %v1106
        %vm1110 = vcmask 60416
        %1111 = vst.msk [vmem:[#allocation3] sm:$0xf] %vm1110, %v1108
        %1112 = vst.msk [vmem:[#allocation3 + $0x4] sm:$0xf] %vm1110, %v1109
        %1113 = vrot.lane.b32.xlu0 %v1040, 120
        %v1114 = vpop.permute.xlu0 %1113
        %1115 = vrot.lane.b32.xlu0 %v1040, 88
        %v1116 = vpop.permute.xlu0 %1115
        %v1118 = vsel %vm1043, %v1114, 0
        %v1121 = vsel %vm1043, %v1116, 0
        %1123 = vmatpush.bf16.xpose.msra.mxu0 0
        %1124 = vmatpush.bf16.xpose.msra.mxu0 0
        %1125 = vmatpush.bf16.xpose.msra.mxu0 0
        %1126 = vmatpush.bf16.xpose.msra.mxu0 0
        %1127 = vmatpush.bf16.xpose.msra.mxu0 0
        %1128 = vmatpush.bf16.xpose.msra.mxu0 0
        %1129 = vmatpush.bf16.xpose.msra.mxu0 0
        %1130 = vmatpush.bf16.xpose.msra.mxu0 %v1121
        %1131 = vmatmul.bf16.gmra.mxu0 %v1118
        %v1132 = vpop.f32.mrf.mxu0
        %v1133 = vadd.f32 0.0, %v1132
        %v1134 = vpop.f32.mrf.mxu0
        %v1135 = vadd.f32 0.0, %v1134
        %1136 = vdwg.mxu0
        %v1137 = vsel %vm1064, %v1133, -inf
        %1138 = vmax.xlane.f32.xlu0 %v1137
        %v1139 = vpop.xlane.xlu0 %1138
        %v1140 = vsel %vm1064, %v1135, -inf
        %1141 = vmax.xlane.f32.xlu0 %v1140
        %v1142 = vpop.xlane.xlu0 %1141
        %v1143 = vsub.f32 %v1133, %v1139
        %v1144 = vsub.f32 %v1135, %v1142
        %v1145 = vmul.f32 %v1143, 1.442695
        %v1146 = vpow.pop %v1145
        %v1147 = vmul.f32 %v1144, 1.442695
        %v1148 = vpow.pop %v1147
        %v1149 = vsel %vm1064, %v1146, 0.0
        %1150 = vadd.xlane.f32.xlu0 %v1149
        %v1151 = vpop.xlane.xlu0 %1150
        %v1152 = vsel %vm1064, %v1148, 0.0
        %1153 = vadd.xlane.f32.xlu0 %v1152
        %v1154 = vpop.xlane.xlu0 %1153
        %v1155 = vrcp.pop %v1151
        %v1156 = vrcp.pop %v1154
        %v1157 = vmul.f32 %v1146, %v1155
        %v1158 = vmul.f32 %v1148, %v1156
        %v1159 = vpack.c.bf16 %v1158, %v1157
        %1160 = vrot.lane.b32.xlu0 %v1040, 56
        %v1161 = vpop.permute.xlu0 %1160
        %v1164 = vsel %vm1064, %v1159, 0
        %1166 = vmatpush.bf16.msra.mxu0 0
        %1167 = vmatpush.bf16.msra.mxu0 0
        %1168 = vmatpush.bf16.msra.mxu0 0
        %1169 = vmatpush.bf16.msra.mxu0 0
        %1170 = vmatpush.bf16.msra.mxu0 0
        %1171 = vmatpush.bf16.msra.mxu0 0
        %1172 = vmatpush.bf16.msra.mxu0 0
        %1173 = vmatpush.bf16.msra.mxu0 %v1161
        %1174 = vmatmul.bf16.gmra.mxu0 %v1164
        %v1175 = vpop.f32.mrf.mxu0
        %v1176 = vadd.f32 0.0, %v1175
        %v1177 = vpop.f32.mrf.mxu0
        %v1178 = vadd.f32 0.0, %v1177
        %1179 = vdwg.mxu0
        %v1180 = vpack.c.bf16 %v1176, %v1176
        %v1181 = vpack.c.bf16 %v1178, %v1178
        %1184 = vrot.lane.b32.xlu0 %v1180, 8
        %v1185 = vpop.permute.xlu0 %1184
        %1186 = vrot.lane.b32.xlu0 %v1181, 8
        %v1187 = vpop.permute.xlu0 %1186
        %vm1190 = vcmask 126016
        %1191 = vst.msk [vmem:[#allocation3] sm:$0xf] %vm1190, %v1185
        %1192 = vst.msk [vmem:[#allocation3 + $0x4] sm:$0xf] %vm1190, %v1187
        %1193 = vrot.lane.b32.xlu0 %v1040, 112
        %v1194 = vpop.permute.xlu0 %1193
        %1195 = vrot.lane.b32.xlu0 %v1040, 80
        %v1196 = vpop.permute.xlu0 %1195
        %v1198 = vsel %vm1043, %v1194, 0
        %v1201 = vsel %vm1043, %v1196, 0
        %1203 = vmatpush.bf16.xpose.msra.mxu0 0
        %1204 = vmatpush.bf16.xpose.msra.mxu0 0
        %1205 = vmatpush.bf16.xpose.msra.mxu0 0
        %1206 = vmatpush.bf16.xpose.msra.mxu0 0
        %1207 = vmatpush.bf16.xpose.msra.mxu0 0
        %1208 = vmatpush.bf16.xpose.msra.mxu0 0
        %1209 = vmatpush.bf16.xpose.msra.mxu0 0
        %1210 = vmatpush.bf16.xpose.msra.mxu0 %v1201
        %1211 = vmatmul.bf16.gmra.mxu0 %v1198
        %v1212 = vpop.f32.mrf.mxu0
        %v1213 = vadd.f32 0.0, %v1212
        %v1214 = vpop.f32.mrf.mxu0
        %v1215 = vadd.f32 0.0, %v1214
        %1216 = vdwg.mxu0
        %v1217 = vsel %vm1064, %v1213, -inf
        %1218 = vmax.xlane.f32.xlu0 %v1217
        %v1219 = vpop.xlane.xlu0 %1218
        %v1220 = vsel %vm1064, %v1215, -inf
        %1221 = vmax.xlane.f32.xlu0 %v1220
        %v1222 = vpop.xlane.xlu0 %1221
        %v1223 = vsub.f32 %v1213, %v1219
        %v1224 = vsub.f32 %v1215, %v1222
        %v1225 = vmul.f32 %v1223, 1.442695
        %v1226 = vpow.pop %v1225
        %v1227 = vmul.f32 %v1224, 1.442695
        %v1228 = vpow.pop %v1227
        %v1229 = vsel %vm1064, %v1226, 0.0
        %1230 = vadd.xlane.f32.xlu0 %v1229
        %v1231 = vpop.xlane.xlu0 %1230
        %v1232 = vsel %vm1064, %v1228, 0.0
        %1233 = vadd.xlane.f32.xlu0 %v1232
        %v1234 = vpop.xlane.xlu0 %1233
        %v1235 = vrcp.pop %v1231
        %v1236 = vrcp.pop %v1234
        %v1237 = vmul.f32 %v1226, %v1235
        %v1238 = vmul.f32 %v1228, %v1236
        %v1239 = vpack.c.bf16 %v1238, %v1237
        %1240 = vrot.lane.b32.xlu0 %v1040, 48
        %v1241 = vpop.permute.xlu0 %1240
        %v1244 = vsel %vm1064, %v1239, 0
        %1246 = vmatpush.bf16.msra.mxu0 0
        %1247 = vmatpush.bf16.msra.mxu0 0
        %1248 = vmatpush.bf16.msra.mxu0 0
        %1249 = vmatpush.bf16.msra.mxu0 0
        %1250 = vmatpush.bf16.msra.mxu0 0
        %1251 = vmatpush.bf16.msra.mxu0 0
        %1252 = vmatpush.bf16.msra.mxu0 0
        %1253 = vmatpush.bf16.msra.mxu0 %v1241
        %1254 = vmatmul.bf16.gmra.mxu0 %v1244
        %v1255 = vpop.f32.mrf.mxu0
        %v1256 = vadd.f32 0.0, %v1255
        %v1257 = vpop.f32.mrf.mxu0
        %v1258 = vadd.f32 0.0, %v1257
        %1259 = vdwg.mxu0
        %v1260 = vpack.c.bf16 %v1256, %v1256
        %v1261 = vpack.c.bf16 %v1258, %v1258
        %1264 = vrot.lane.b32.xlu0 %v1260, 16
        %v1265 = vpop.permute.xlu0 %1264
        %1266 = vrot.lane.b32.xlu0 %v1261, 16
        %v1267 = vpop.permute.xlu0 %1266
        %vm1270 = vcmask 191616
        %1271 = vst.msk [vmem:[#allocation3] sm:$0xf] %vm1270, %v1265
        %1272 = vst.msk [vmem:[#allocation3 + $0x4] sm:$0xf] %vm1270, %v1267
        %1273 = vrot.lane.b32.xlu0 %v1040, 104
        %v1274 = vpop.permute.xlu0 %1273
        %1275 = vrot.lane.b32.xlu0 %v1040, 72
        %v1276 = vpop.permute.xlu0 %1275
        %v1278 = vsel %vm1043, %v1274, 0
        %v1281 = vsel %vm1043, %v1276, 0
        %1283 = vmatpush.bf16.xpose.msra.mxu0 0
        %1284 = vmatpush.bf16.xpose.msra.mxu0 0
        %1285 = vmatpush.bf16.xpose.msra.mxu0 0
        %1286 = vmatpush.bf16.xpose.msra.mxu0 0
        %1287 = vmatpush.bf16.xpose.msra.mxu0 0
        %1288 = vmatpush.bf16.xpose.msra.mxu0 0
        %1289 = vmatpush.bf16.xpose.msra.mxu0 0
        %1290 = vmatpush.bf16.xpose.msra.mxu0 %v1281
        %1291 = vmatmul.bf16.gmra.mxu0 %v1278
        %v1292 = vpop.f32.mrf.mxu0
        %v1293 = vadd.f32 0.0, %v1292
        %v1294 = vpop.f32.mrf.mxu0
        %v1295 = vadd.f32 0.0, %v1294
        %1296 = vdwg.mxu0
        %v1297 = vsel %vm1064, %v1293, -inf
        %1298 = vmax.xlane.f32.xlu0 %v1297
        %v1299 = vpop.xlane.xlu0 %1298
        %v1300 = vsel %vm1064, %v1295, -inf
        %1301 = vmax.xlane.f32.xlu0 %v1300
        %v1302 = vpop.xlane.xlu0 %1301
        %v1303 = vsub.f32 %v1293, %v1299
        %v1304 = vsub.f32 %v1295, %v1302
        %v1305 = vmul.f32 %v1303, 1.442695
        %v1306 = vpow.pop %v1305
        %v1307 = vmul.f32 %v1304, 1.442695
        %v1308 = vpow.pop %v1307
        %v1309 = vsel %vm1064, %v1306, 0.0
        %1310 = vadd.xlane.f32.xlu0 %v1309
        %v1311 = vpop.xlane.xlu0 %1310
        %v1312 = vsel %vm1064, %v1308, 0.0
        %1313 = vadd.xlane.f32.xlu0 %v1312
        %v1314 = vpop.xlane.xlu0 %1313
        %v1315 = vrcp.pop %v1311
        %v1316 = vrcp.pop %v1314
        %v1317 = vmul.f32 %v1306, %v1315
        %v1318 = vmul.f32 %v1308, %v1316
        %v1319 = vpack.c.bf16 %v1318, %v1317
        %1320 = vrot.lane.b32.xlu0 %v1040, 40
        %v1321 = vpop.permute.xlu0 %1320
        %v1324 = vsel %vm1064, %v1319, 0
        %1326 = vmatpush.bf16.msra.mxu0 0
        %1327 = vmatpush.bf16.msra.mxu0 0
        %1328 = vmatpush.bf16.msra.mxu0 0
        %1329 = vmatpush.bf16.msra.mxu0 0
        %1330 = vmatpush.bf16.msra.mxu0 0
        %1331 = vmatpush.bf16.msra.mxu0 0
        %1332 = vmatpush.bf16.msra.mxu0 0
        %1333 = vmatpush.bf16.msra.mxu0 %v1321
        %1334 = vmatmul.bf16.gmra.mxu0 %v1324
        %v1335 = vpop.f32.mrf.mxu0
        %v1336 = vadd.f32 0.0, %v1335
        %v1337 = vpop.f32.mrf.mxu0
        %v1338 = vadd.f32 0.0, %v1337
        %1339 = vdwg.mxu0
        %v1340 = vpack.c.bf16 %v1336, %v1336
        %v1341 = vpack.c.bf16 %v1338, %v1338
        %1344 = vrot.lane.b32.xlu0 %v1340, 24
        %v1345 = vpop.permute.xlu0 %1344
        %1346 = vrot.lane.b32.xlu0 %v1341, 24
        %v1347 = vpop.permute.xlu0 %1346
        %vm1350 = vcmask 257216
        %1351 = vst.msk [vmem:[#allocation3] sm:$0xf] %vm1350, %v1345
        %1352 = vst.msk [vmem:[#allocation3 + $0x4] sm:$0xf] %vm1350, %v1347
        %v1355 = vunpack.c.l.b16 %v1034
        %v1356 = vunpack.c.l.b16 %v1035
        %v1357 = vpack.c.b16 %v1356, %v1355
        %1358 = vrot.lane.b32.xlu0 %v1357, 96
        %v1359 = vpop.permute.xlu0 %1358
        %v1361 = vsel %vm1043, %v1357, 0
        %v1364 = vsel %vm1043, %v1359, 0
        %1366 = vmatpush.bf16.xpose.msra.mxu0 0
        %1367 = vmatpush.bf16.xpose.msra.mxu0 0
        %1368 = vmatpush.bf16.xpose.msra.mxu0 0
        %1369 = vmatpush.bf16.xpose.msra.mxu0 0
        %1370 = vmatpush.bf16.xpose.msra.mxu0 0
        %1371 = vmatpush.bf16.xpose.msra.mxu0 0
        %1372 = vmatpush.bf16.xpose.msra.mxu0 0
        %1373 = vmatpush.bf16.xpose.msra.mxu0 %v1364
        %1374 = vmatmul.bf16.gmra.mxu0 %v1361
        %v1375 = vpop.f32.mrf.mxu0
        %v1376 = vadd.f32 0.0, %v1375
        %v1377 = vpop.f32.mrf.mxu0
        %v1378 = vadd.f32 0.0, %v1377
        %1379 = vdwg.mxu0
        %v1380 = vsel %vm1064, %v1376, -inf
        %1381 = vmax.xlane.f32.xlu0 %v1380
        %v1382 = vpop.xlane.xlu0 %1381
        %v1383 = vsel %vm1064, %v1378, -inf
        %1384 = vmax.xlane.f32.xlu0 %v1383
        %v1385 = vpop.xlane.xlu0 %1384
        %v1386 = vsub.f32 %v1376, %v1382
        %v1387 = vsub.f32 %v1378, %v1385
        %v1388 = vmul.f32 %v1386, 1.442695
        %v1389 = vpow.pop %v1388
        %v1390 = vmul.f32 %v1387, 1.442695
        %v1391 = vpow.pop %v1390
        %v1392 = vsel %vm1064, %v1389, 0.0
        %1393 = vadd.xlane.f32.xlu0 %v1392
        %v1394 = vpop.xlane.xlu0 %1393
        %v1395 = vsel %vm1064, %v1391, 0.0
        %1396 = vadd.xlane.f32.xlu0 %v1395
        %v1397 = vpop.xlane.xlu0 %1396
        %v1398 = vrcp.pop %v1394
        %v1399 = vrcp.pop %v1397
        %v1400 = vmul.f32 %v1389, %v1398
        %v1401 = vmul.f32 %v1391, %v1399
        %v1402 = vpack.c.bf16 %v1401, %v1400
        %1403 = vrot.lane.b32.xlu0 %v1357, 64
        %v1404 = vpop.permute.xlu0 %1403
        %v1407 = vsel %vm1064, %v1402, 0
        %1409 = vmatpush.bf16.msra.mxu0 0
        %1410 = vmatpush.bf16.msra.mxu0 0
        %1411 = vmatpush.bf16.msra.mxu0 0
        %1412 = vmatpush.bf16.msra.mxu0 0
        %1413 = vmatpush.bf16.msra.mxu0 0
        %1414 = vmatpush.bf16.msra.mxu0 0
        %1415 = vmatpush.bf16.msra.mxu0 0
        %1416 = vmatpush.bf16.msra.mxu0 %v1404
        %1417 = vmatmul.bf16.gmra.mxu0 %v1407
        %v1418 = vpop.f32.mrf.mxu0
        %v1419 = vadd.f32 0.0, %v1418
        %v1420 = vpop.f32.mrf.mxu0
        %v1421 = vadd.f32 0.0, %v1420
        %1422 = vdwg.mxu0
        %v1423 = vpack.c.bf16 %v1419, %v1419
        %v1424 = vpack.c.bf16 %v1421, %v1421
        %s1425 = scalar_lea.vmem [#allocation3], 8
        %1426 = vst.msk [vmem:[%s1425] sm:$0xf] %vm1110, %v1423
        %1427 = vst.msk [vmem:[%s1425 + $0x4] sm:$0xf] %vm1110, %v1424
        %1428 = vrot.lane.b32.xlu0 %v1357, 120
        %v1429 = vpop.permute.xlu0 %1428
        %1430 = vrot.lane.b32.xlu0 %v1357, 88
        %v1431 = vpop.permute.xlu0 %1430
        %v1433 = vsel %vm1043, %v1429, 0
        %v1436 = vsel %vm1043, %v1431, 0
        %1438 = vmatpush.bf16.xpose.msra.mxu0 0
        %1439 = vmatpush.bf16.xpose.msra.mxu0 0
        %1440 = vmatpush.bf16.xpose.msra.mxu0 0
        %1441 = vmatpush.bf16.xpose.msra.mxu0 0
        %1442 = vmatpush.bf16.xpose.msra.mxu0 0
        %1443 = vmatpush.bf16.xpose.msra.mxu0 0
        %1444 = vmatpush.bf16.xpose.msra.mxu0 0
        %1445 = vmatpush.bf16.xpose.msra.mxu0 %v1436
        %1446 = vmatmul.bf16.gmra.mxu0 %v1433
        %v1447 = vpop.f32.mrf.mxu0
        %v1448 = vadd.f32 0.0, %v1447
        %v1449 = vpop.f32.mrf.mxu0
        %v1450 = vadd.f32 0.0, %v1449
        %1451 = vdwg.mxu0
        %v1452 = vsel %vm1064, %v1448, -inf
        %1453 = vmax.xlane.f32.xlu0 %v1452
        %v1454 = vpop.xlane.xlu0 %1453
        %v1455 = vsel %vm1064, %v1450, -inf
        %1456 = vmax.xlane.f32.xlu0 %v1455
        %v1457 = vpop.xlane.xlu0 %1456
        %v1458 = vsub.f32 %v1448, %v1454
        %v1459 = vsub.f32 %v1450, %v1457
        %v1460 = vmul.f32 %v1458, 1.442695
        %v1461 = vpow.pop %v1460
        %v1462 = vmul.f32 %v1459, 1.442695
        %v1463 = vpow.pop %v1462
        %v1464 = vsel %vm1064, %v1461, 0.0
        %1465 = vadd.xlane.f32.xlu0 %v1464
        %v1466 = vpop.xlane.xlu0 %1465
        %v1467 = vsel %vm1064, %v1463, 0.0
        %1468 = vadd.xlane.f32.xlu0 %v1467
        %v1469 = vpop.xlane.xlu0 %1468
        %v1470 = vrcp.pop %v1466
        %v1471 = vrcp.pop %v1469
        %v1472 = vmul.f32 %v1461, %v1470
        %v1473 = vmul.f32 %v1463, %v1471
        %v1474 = vpack.c.bf16 %v1473, %v1472
        %1475 = vrot.lane.b32.xlu0 %v1357, 56
        %v1476 = vpop.permute.xlu0 %1475
        %v1479 = vsel %vm1064, %v1474, 0
        %1481 = vmatpush.bf16.msra.mxu0 0
        %1482 = vmatpush.bf16.msra.mxu0 0
        %1483 = vmatpush.bf16.msra.mxu0 0
        %1484 = vmatpush.bf16.msra.mxu0 0
        %1485 = vmatpush.bf16.msra.mxu0 0
        %1486 = vmatpush.bf16.msra.mxu0 0
        %1487 = vmatpush.bf16.msra.mxu0 0
        %1488 = vmatpush.bf16.msra.mxu0 %v1476
        %1489 = vmatmul.bf16.gmra.mxu0 %v1479
        %v1490 = vpop.f32.mrf.mxu0
        %v1491 = vadd.f32 0.0, %v1490
        %v1492 = vpop.f32.mrf.mxu0
        %v1493 = vadd.f32 0.0, %v1492
        %1494 = vdwg.mxu0
        %v1495 = vpack.c.bf16 %v1491, %v1491
        %v1496 = vpack.c.bf16 %v1493, %v1493
        %1499 = vrot.lane.b32.xlu0 %v1495, 8
        %v1500 = vpop.permute.xlu0 %1499
        %1501 = vrot.lane.b32.xlu0 %v1496, 8
        %v1502 = vpop.permute.xlu0 %1501
        %1505 = vst.msk [vmem:[%s1425] sm:$0xf] %vm1190, %v1500
        %1506 = vst.msk [vmem:[%s1425 + $0x4] sm:$0xf] %vm1190, %v1502
        %1507 = vrot.lane.b32.xlu0 %v1357, 112
        %v1508 = vpop.permute.xlu0 %1507
        %1509 = vrot.lane.b32.xlu0 %v1357, 80
        %v1510 = vpop.permute.xlu0 %1509
        %v1512 = vsel %vm1043, %v1508, 0
        %v1515 = vsel %vm1043, %v1510, 0
        %1517 = vmatpush.bf16.xpose.msra.mxu0 0
        %1518 = vmatpush.bf16.xpose.msra.mxu0 0
        %1519 = vmatpush.bf16.xpose.msra.mxu0 0
        %1520 = vmatpush.bf16.xpose.msra.mxu0 0
        %1521 = vmatpush.bf16.xpose.msra.mxu0 0
        %1522 = vmatpush.bf16.xpose.msra.mxu0 0
        %1523 = vmatpush.bf16.xpose.msra.mxu0 0
        %1524 = vmatpush.bf16.xpose.msra.mxu0 %v1515
        %1525 = vmatmul.bf16.gmra.mxu0 %v1512
        %v1526 = vpop.f32.mrf.mxu0
        %v1527 = vadd.f32 0.0, %v1526
        %v1528 = vpop.f32.mrf.mxu0
        %v1529 = vadd.f32 0.0, %v1528
        %1530 = vdwg.mxu0
        %v1531 = vsel %vm1064, %v1527, -inf
        %1532 = vmax.xlane.f32.xlu0 %v1531
        %v1533 = vpop.xlane.xlu0 %1532
        %v1534 = vsel %vm1064, %v1529, -inf
        %1535 = vmax.xlane.f32.xlu0 %v1534
        %v1536 = vpop.xlane.xlu0 %1535
        %v1537 = vsub.f32 %v1527, %v1533
        %v1538 = vsub.f32 %v1529, %v1536
        %v1539 = vmul.f32 %v1537, 1.442695
        %v1540 = vpow.pop %v1539
        %v1541 = vmul.f32 %v1538, 1.442695
        %v1542 = vpow.pop %v1541
        %v1543 = vsel %vm1064, %v1540, 0.0
        %1544 = vadd.xlane.f32.xlu0 %v1543
        %v1545 = vpop.xlane.xlu0 %1544
        %v1546 = vsel %vm1064, %v1542, 0.0
        %1547 = vadd.xlane.f32.xlu0 %v1546
        %v1548 = vpop.xlane.xlu0 %1547
        %v1549 = vrcp.pop %v1545
        %v1550 = vrcp.pop %v1548
        %v1551 = vmul.f32 %v1540, %v1549
        %v1552 = vmul.f32 %v1542, %v1550
        %v1553 = vpack.c.bf16 %v1552, %v1551
        %1554 = vrot.lane.b32.xlu0 %v1357, 48
        %v1555 = vpop.permute.xlu0 %1554
        %v1558 = vsel %vm1064, %v1553, 0
        %1560 = vmatpush.bf16.msra.mxu0 0
        %1561 = vmatpush.bf16.msra.mxu0 0
        %1562 = vmatpush.bf16.msra.mxu0 0
        %1563 = vmatpush.bf16.msra.mxu0 0
        %1564 = vmatpush.bf16.msra.mxu0 0
        %1565 = vmatpush.bf16.msra.mxu0 0
        %1566 = vmatpush.bf16.msra.mxu0 0
        %1567 = vmatpush.bf16.msra.mxu0 %v1555
        %1568 = vmatmul.bf16.gmra.mxu0 %v1558
        %v1569 = vpop.f32.mrf.mxu0
        %v1570 = vadd.f32 0.0, %v1569
        %v1571 = vpop.f32.mrf.mxu0
        %v1572 = vadd.f32 0.0, %v1571
        %1573 = vdwg.mxu0
        %v1574 = vpack.c.bf16 %v1570, %v1570
        %v1575 = vpack.c.bf16 %v1572, %v1572
        %1578 = vrot.lane.b32.xlu0 %v1574, 16
        %v1579 = vpop.permute.xlu0 %1578
        %1580 = vrot.lane.b32.xlu0 %v1575, 16
        %v1581 = vpop.permute.xlu0 %1580
        %1584 = vst.msk [vmem:[%s1425] sm:$0xf] %vm1270, %v1579
        %1585 = vst.msk [vmem:[%s1425 + $0x4] sm:$0xf] %vm1270, %v1581
        %1586 = vrot.lane.b32.xlu0 %v1357, 104
        %v1587 = vpop.permute.xlu0 %1586
        %1588 = vrot.lane.b32.xlu0 %v1357, 72
        %v1589 = vpop.permute.xlu0 %1588
        %v1591 = vsel %vm1043, %v1587, 0
        %v1594 = vsel %vm1043, %v1589, 0
        %1596 = vmatpush.bf16.xpose.msra.mxu0 0
        %1597 = vmatpush.bf16.xpose.msra.mxu0 0
        %1598 = vmatpush.bf16.xpose.msra.mxu0 0
        %1599 = vmatpush.bf16.xpose.msra.mxu0 0
        %1600 = vmatpush.bf16.xpose.msra.mxu0 0
        %1601 = vmatpush.bf16.xpose.msra.mxu0 0
        %1602 = vmatpush.bf16.xpose.msra.mxu0 0
        %1603 = vmatpush.bf16.xpose.msra.mxu0 %v1594
        %1604 = vmatmul.bf16.gmra.mxu0 %v1591
        %v1605 = vpop.f32.mrf.mxu0
        %v1606 = vadd.f32 0.0, %v1605
        %v1607 = vpop.f32.mrf.mxu0
        %v1608 = vadd.f32 0.0, %v1607
        %1609 = vdwg.mxu0
        %v1610 = vsel %vm1064, %v1606, -inf
        %1611 = vmax.xlane.f32.xlu0 %v1610
        %v1612 = vpop.xlane.xlu0 %1611
        %v1613 = vsel %vm1064, %v1608, -inf
        %1614 = vmax.xlane.f32.xlu0 %v1613
        %v1615 = vpop.xlane.xlu0 %1614
        %v1616 = vsub.f32 %v1606, %v1612
        %v1617 = vsub.f32 %v1608, %v1615
        %v1618 = vmul.f32 %v1616, 1.442695
        %v1619 = vpow.pop %v1618
        %v1620 = vmul.f32 %v1617, 1.442695
        %v1621 = vpow.pop %v1620
        %v1622 = vsel %vm1064, %v1619, 0.0
        %1623 = vadd.xlane.f32.xlu0 %v1622
        %v1624 = vpop.xlane.xlu0 %1623
        %v1625 = vsel %vm1064, %v1621, 0.0
        %1626 = vadd.xlane.f32.xlu0 %v1625
        %v1627 = vpop.xlane.xlu0 %1626
        %v1628 = vrcp.pop %v1624
        %v1629 = vrcp.pop %v1627
        %v1630 = vmul.f32 %v1619, %v1628
        %v1631 = vmul.f32 %v1621, %v1629
        %v1632 = vpack.c.bf16 %v1631, %v1630
        %1633 = vrot.lane.b32.xlu0 %v1357, 40
        %v1634 = vpop.permute.xlu0 %1633
        %v1637 = vsel %vm1064, %v1632, 0
        %1639 = vmatpush.bf16.msra.mxu0 0
        %1640 = vmatpush.bf16.msra.mxu0 0
        %1641 = vmatpush.bf16.msra.mxu0 0
        %1642 = vmatpush.bf16.msra.mxu0 0
        %1643 = vmatpush.bf16.msra.mxu0 0
        %1644 = vmatpush.bf16.msra.mxu0 0
        %1645 = vmatpush.bf16.msra.mxu0 0
        %1646 = vmatpush.bf16.msra.mxu0 %v1634
        %1647 = vmatmul.bf16.gmra.mxu0 %v1637
        %v1648 = vpop.f32.mrf.mxu0
        %v1649 = vadd.f32 0.0, %v1648
        %v1650 = vpop.f32.mrf.mxu0
        %v1651 = vadd.f32 0.0, %v1650
        %1652 = vdwg.mxu0
        %v1653 = vpack.c.bf16 %v1649, %v1649
        %v1654 = vpack.c.bf16 %v1651, %v1651
        %1657 = vrot.lane.b32.xlu0 %v1653, 24
        %v1658 = vpop.permute.xlu0 %1657
        %1659 = vrot.lane.b32.xlu0 %v1654, 24
        %v1660 = vpop.permute.xlu0 %1659
        %1663 = vst.msk [vmem:[%s1425] sm:$0xf] %vm1350, %v1658
        %1664 = vst.msk [vmem:[%s1425 + $0x4] sm:$0xf] %vm1350, %v1660
        %v1665 = vld [vmem:[#allocation3] sm:$0xf]
        %v1666 = vld [vmem:[#allocation3 + $0x4] sm:$0xf]
        %v1667 = vld [vmem:[#allocation3 + $0x8] sm:$0xf]
        %v1668 = vld [vmem:[#allocation3 + $0xc] sm:$0xf]
        %v1669 = vld [vmem:[%s750] sm:$0xf]
        %v1670 = vld [vmem:[%s750 + $0x4] sm:$0xf]
        %v1671 = vld [vmem:[%s750 + $0x8] sm:$0xf]
        %v1672 = vld [vmem:[%s750 + $0xc] sm:$0xf]
        %v1673 = vld [vmem:[%s753] sm:$0x1]
        %v1675 = vperm.slane %v1673, 0
        %v1681 = vunpack.c.l.b16 %v1665
        %v1682 = vunpack.c.l.b16 %v1666
        %v1683 = vunpack.c.l.b16 %v1667
        %v1684 = vunpack.c.l.b16 %v1668
        %v1685 = vpack.c.b16 %v1682, %v1681
        %v1686 = vpack.c.b16 %v1684, %v1683
        %v1691 = vunpack.c.l.b16 %v1669
        %v1692 = vunpack.c.l.b16 %v1670
        %v1693 = vunpack.c.l.b16 %v1671
        %v1694 = vunpack.c.l.b16 %v1672
        %v1695 = vpack.c.b16 %v1692, %v1691
        %v1696 = vpack.c.b16 %v1694, %v1693
        %v1700 = vsel %vm875, %v1685, 0
        %v1703 = vsel %vm875, %v1686, 0
        %1705 = vmatpush.bf16.msra.mxu0 0
        %1706 = vmatpush.bf16.msra.mxu0 0
        %1707 = vmatpush.bf16.msra.mxu0 0
        %1708 = vmatpush.bf16.msra.mxu0 0
        %1709 = vmatpush.bf16.msra.mxu0 0
        %1710 = vmatpush.bf16.msra.mxu0 0
        %1711 = vmatpush.bf16.msra.mxu0 %v1696
        %1712 = vmatpush.bf16.msra.mxu0 %v1695
        %1713 = vmatmul.bf16.gmra.mxu0 %v1700
        %v1714 = vpop.f32.mrf.mxu0
        %v1715 = vadd.f32 %v1675, %v1714
        %v1716 = vpop.f32.mrf.mxu0
        %v1717 = vadd.f32 %v1675, %v1716
        %1718 = vmatmul.bf16.gmra.mxu0 %v1703
        %v1719 = vpop.f32.mrf.mxu0
        %v1720 = vadd.f32 %v1675, %v1719
        %v1721 = vpop.f32.mrf.mxu0
        %v1722 = vadd.f32 %v1675, %v1721
        %1723 = vdwg.mxu0
        %v1724 = vadd.f32 %v869, %v1715
        %v1725 = vadd.f32 %v870, %v1717
        %v1726 = vadd.f32 %v871, %v1720
        %v1727 = vadd.f32 %v872, %v1722
        %v1728 = vld [vmem:[%s756] sm:$0x1]
        %v1729 = vld [vmem:[%s759] sm:$0x1]
        %v1730 = vsel %vm875, %v1724, 0.0
        %1731 = vadd.xlane.f32.xlu0 %v1730
        %v1732 = vpop.xlane.xlu0 %1731
        %v1733 = vsel %vm875, %v1725, 0.0
        %1734 = vadd.xlane.f32.xlu0 %v1733
        %v1735 = vpop.xlane.xlu0 %1734
        %v1736 = vsel %vm875, %v1726, 0.0
        %1737 = vadd.xlane.f32.xlu0 %v1736
        %v1738 = vpop.xlane.xlu0 %1737
        %v1739 = vsel %vm875, %v1727, 0.0
        %1740 = vadd.xlane.f32.xlu0 %v1739
        %v1741 = vpop.xlane.xlu0 %1740
        %v1742 = vmul.f32 %v1732, %v894
        %v1743 = vmul.f32 %v1735, %v894
        %v1744 = vmul.f32 %v1738, %v894
        %v1745 = vmul.f32 %v1741, %v894
        %v1746 = vsub.f32 %v1724, %v1742
        %v1747 = vsub.f32 %v1725, %v1743
        %v1748 = vsub.f32 %v1726, %v1744
        %v1749 = vsub.f32 %v1727, %v1745
        %v1750 = vmul.f32 %v1746, %v1746
        %v1751 = vmul.f32 %v1747, %v1747
        %v1752 = vmul.f32 %v1748, %v1748
        %v1753 = vmul.f32 %v1749, %v1749
        %v1754 = vsel %vm875, %v1750, 0.0
        %1755 = vadd.xlane.f32.xlu0 %v1754
        %v1756 = vpop.xlane.xlu0 %1755
        %v1757 = vsel %vm875, %v1751, 0.0
        %1758 = vadd.xlane.f32.xlu0 %v1757
        %v1759 = vpop.xlane.xlu0 %1758
        %v1760 = vsel %vm875, %v1752, 0.0
        %1761 = vadd.xlane.f32.xlu0 %v1760
        %v1762 = vpop.xlane.xlu0 %1761
        %v1763 = vsel %vm875, %v1753, 0.0
        %1764 = vadd.xlane.f32.xlu0 %v1763
        %v1765 = vpop.xlane.xlu0 %1764
        %v1766 = vmul.f32 %v1756, %v894
        %v1767 = vmul.f32 %v1759, %v894
        %v1768 = vmul.f32 %v1762, %v894
        %v1769 = vmul.f32 %v1765, %v894
        %v1770 = vadd.f32 %v1766, 1e-06
        %v1771 = vadd.f32 %v1767, 1e-06
        %v1772 = vadd.f32 %v1768, 1e-06
        %v1773 = vadd.f32 %v1769, 1e-06
        %v1774 = vrsqrt.pop %v1770
        %v1775 = vmul.f32 %v1774, %v1770
        %v1776 = vmul.f32 %v1775, %v1774
        %v1777 = vmul.f32 0.5, %v1776
        %v1778 = vsub.f32 1.5, %v1777
        %v1779 = vmul.f32 %v1774, %v1778
        %vm1780 = vweird.f32 %v1770
        %vm1781 = vweird.f32 %v1774
        %vm1782 = vmor %vm1780, %vm1781
        %v1783 = vsel %vm1782, %v1774, %v1779
        %v1784 = vrsqrt.pop %v1771
        %v1785 = vmul.f32 %v1784, %v1771
        %v1786 = vmul.f32 %v1785, %v1784
        %v1787 = vmul.f32 0.5, %v1786
        %v1788 = vsub.f32 1.5, %v1787
        %v1789 = vmul.f32 %v1784, %v1788
        %vm1790 = vweird.f32 %v1771
        %vm1791 = vweird.f32 %v1784
        %vm1792 = vmor %vm1790, %vm1791
        %v1793 = vsel %vm1792, %v1784, %v1789
        %v1794 = vrsqrt.pop %v1772
        %v1795 = vmul.f32 %v1794, %v1772
        %v1796 = vmul.f32 %v1795, %v1794
        %v1797 = vmul.f32 0.5, %v1796
        %v1798 = vsub.f32 1.5, %v1797
        %v1799 = vmul.f32 %v1794, %v1798
        %vm1800 = vweird.f32 %v1772
        %vm1801 = vweird.f32 %v1794
        %vm1802 = vmor %vm1800, %vm1801
        %v1803 = vsel %vm1802, %v1794, %v1799
        %v1804 = vrsqrt.pop %v1773
        %v1805 = vmul.f32 %v1804, %v1773
        %v1806 = vmul.f32 %v1805, %v1804
        %v1807 = vmul.f32 0.5, %v1806
        %v1808 = vsub.f32 1.5, %v1807
        %v1809 = vmul.f32 %v1804, %v1808
        %vm1810 = vweird.f32 %v1773
        %vm1811 = vweird.f32 %v1804
        %vm1812 = vmor %vm1810, %vm1811
        %v1813 = vsel %vm1812, %v1804, %v1809
        %v1814 = vmul.f32 %v1746, %v1783
        %v1815 = vmul.f32 %v1747, %v1793
        %v1816 = vmul.f32 %v1748, %v1803
        %v1817 = vmul.f32 %v1749, %v1813
        %v1819 = vperm.slane %v1728, 0
        %v1821 = vmul.f32 %v1814, %v1819
        %v1822 = vmul.f32 %v1815, %v1819
        %v1823 = vmul.f32 %v1816, %v1819
        %v1824 = vmul.f32 %v1817, %v1819
        %v1826 = vperm.slane %v1729, 0
        %v1828 = vadd.f32 %v1821, %v1826
        %v1829 = vadd.f32 %v1822, %v1826
        %v1830 = vadd.f32 %v1823, %v1826
        %v1831 = vadd.f32 %v1824, %v1826
        %v1832 = vpack.c.bf16 %v1829, %v1828
        %v1833 = vpack.c.bf16 %v1831, %v1830
        %v1834 = vld [vmem:[%s764] sm:$0xf]
        %v1835 = vld [vmem:[%s764 + $0x4] sm:$0xf]
        %v1836 = vld [vmem:[%s764 + $0x8] sm:$0xf]
        %v1837 = vld [vmem:[%s764 + $0xc] sm:$0xf]
        %v1838 = vld [vmem:[%s767] sm:$0x1]
        %v1840 = vperm.slane %v1838, 0
        %v1846 = vunpack.c.l.b16 %v1834
        %v1847 = vunpack.c.l.b16 %v1835
        %v1848 = vunpack.c.l.b16 %v1836
        %v1849 = vunpack.c.l.b16 %v1837
        %v1850 = vpack.c.b16 %v1847, %v1846
        %v1851 = vpack.c.b16 %v1849, %v1848
        %v1855 = vsel %vm875, %v1832, 0
        %v1858 = vsel %vm875, %v1833, 0
        %1860 = vmatpush.bf16.msra.mxu0 0
        %1861 = vmatpush.bf16.msra.mxu0 0
        %1862 = vmatpush.bf16.msra.mxu0 0
        %1863 = vmatpush.bf16.msra.mxu0 0
        %1864 = vmatpush.bf16.msra.mxu0 0
        %1865 = vmatpush.bf16.msra.mxu0 0
        %1866 = vmatpush.bf16.msra.mxu0 %v1851
        %1867 = vmatpush.bf16.msra.mxu0 %v1850
        %1868 = vmatmul.bf16.gmra.mxu0 %v1855
        %v1869 = vpop.f32.mrf.mxu0
        %v1870 = vadd.f32 %v1840, %v1869
        %v1871 = vpop.f32.mrf.mxu0
        %v1872 = vadd.f32 %v1840, %v1871
        %1873 = vmatmul.bf16.gmra.mxu0 %v1858
        %v1874 = vpop.f32.mrf.mxu0
        %v1875 = vadd.f32 %v1840, %v1874
        %v1876 = vpop.f32.mrf.mxu0
        %v1877 = vadd.f32 %v1840, %v1876
        %1878 = vdwg.mxu0
        %v1879 = vmul.f32 %v1870, 0.5
        %v1880 = vmul.f32 %v1872, 0.5
        %v1881 = vmul.f32 %v1875, 0.5
        %v1882 = vmul.f32 %v1877, 0.5
        %v1883 = vmul.f32 %v1870, 0.044715
        %v1884 = vmul.f32 %v1872, 0.044715
        %v1885 = vmul.f32 %v1875, 0.044715
        %v1886 = vmul.f32 %v1877, 0.044715
        %v1887 = vmul.f32 %v1883, %v1870
        %v1888 = vmul.f32 %v1884, %v1872
        %v1889 = vmul.f32 %v1885, %v1875
        %v1890 = vmul.f32 %v1886, %v1877
        %v1891 = vmul.f32 %v1887, %v1870
        %v1892 = vmul.f32 %v1888, %v1872
        %v1893 = vmul.f32 %v1889, %v1875
        %v1894 = vmul.f32 %v1890, %v1877
        %v1895 = vadd.f32 %v1870, %v1891
        %v1896 = vadd.f32 %v1872, %v1892
        %v1897 = vadd.f32 %v1875, %v1893
        %v1898 = vadd.f32 %v1877, %v1894
        %v1899 = vmul.f32 %v1895, 0.7978845
        %v1900 = vmul.f32 %v1896, 0.7978845
        %v1901 = vmul.f32 %v1897, 0.7978845
        %v1902 = vmul.f32 %v1898, 0.7978845
        %v1903 = vtanh.pop %v1899
        %v1904 = vtanh.pop %v1900
        %v1905 = vtanh.pop %v1901
        %v1906 = vtanh.pop %v1902
        %v1907 = vadd.f32 %v1903, 1.0
        %v1908 = vadd.f32 %v1904, 1.0
        %v1909 = vadd.f32 %v1905, 1.0
        %v1910 = vadd.f32 %v1906, 1.0
        %v1911 = vmul.f32 %v1879, %v1907
        %v1912 = vmul.f32 %v1880, %v1908
        %v1913 = vmul.f32 %v1881, %v1909
        %v1914 = vmul.f32 %v1882, %v1910
        %v1915 = vpack.c.bf16 %v1912, %v1911
        %v1916 = vpack.c.bf16 %v1914, %v1913
        %v1917 = vld [vmem:[%s772] sm:$0xf]
        %v1918 = vld [vmem:[%s772 + $0x4] sm:$0xf]
        %v1919 = vld [vmem:[%s772 + $0x8] sm:$0xf]
        %v1920 = vld [vmem:[%s772 + $0xc] sm:$0xf]
        %v1921 = vld [vmem:[%s772 + $0x10] sm:$0xf]
        %v1922 = vld [vmem:[%s772 + $0x14] sm:$0xf]
        %v1923 = vld [vmem:[%s772 + $0x18] sm:$0xf]
        %v1924 = vld [vmem:[%s772 + $0x1c] sm:$0xf]
        %v1925 = vld [vmem:[%s775] sm:$0x1]
        %v1927 = vperm.slane %v1925, 0
        %v1937 = vunpack.c.l.b16 %v1917
        %v1938 = vunpack.c.l.b16 %v1918
        %v1939 = vunpack.c.l.b16 %v1919
        %v1940 = vunpack.c.l.b16 %v1920
        %v1941 = vunpack.c.l.b16 %v1921
        %v1942 = vunpack.c.l.b16 %v1922
        %v1943 = vunpack.c.l.b16 %v1923
        %v1944 = vunpack.c.l.b16 %v1924
        %v1945 = vpack.c.b16 %v1938, %v1937
        %v1946 = vpack.c.b16 %v1940, %v1939
        %v1947 = vpack.c.b16 %v1942, %v1941
        %v1948 = vpack.c.b16 %v1944, %v1943
        %vm1953 = vcmask 523264
        %v1955 = vsel %vm1953, %v1915, 0
        %v1958 = vsel %vm1953, %v1916, 0
        %1960 = vmatpush.bf16.msra.mxu0 0
        %1961 = vmatpush.bf16.msra.mxu0 0
        %1962 = vmatpush.bf16.msra.mxu0 0
        %1963 = vmatpush.bf16.msra.mxu0 0
        %1964 = vmatpush.bf16.msra.mxu0 %v1948
        %1965 = vmatpush.bf16.msra.mxu0 %v1947
        %1966 = vmatpush.bf16.msra.mxu0 %v1946
        %1967 = vmatpush.bf16.msra.mxu0 %v1945
        %1968 = vmatmul.bf16.gmra.mxu0 %v1955
        %v1969 = vpop.f32.mrf.mxu0
        %v1970 = vadd.f32 %v1927, %v1969
        %v1971 = vpop.f32.mrf.mxu0
        %v1972 = vadd.f32 %v1927, %v1971
        %1973 = vmatmul.bf16.gmra.mxu0 %v1958
        %v1974 = vpop.f32.mrf.mxu0
        %v1975 = vadd.f32 %v1927, %v1974
        %v1976 = vpop.f32.mrf.mxu0
        %v1977 = vadd.f32 %v1927, %v1976
        %1978 = vdwg.mxu0
        %v1979 = vadd.f32 %v1724, %v1970
        %v1980 = vadd.f32 %v1725, %v1972
        %v1981 = vadd.f32 %v1726, %v1975
        %v1982 = vadd.f32 %v1727, %v1977
        %1983 = vst.msk [vmem:[#allocation2] sm:$0xff] %vm875, %v1979
        %1984 = vst.msk [vmem:[#allocation2 + $0x8] sm:$0xff] %vm875, %v1980
        %1985 = vst.msk [vmem:[#allocation2 + $0x10] sm:$0xff] %vm875, %v1981
        %1986 = vst.msk [vmem:[#allocation2 + $0x18] sm:$0xff] %vm875, %v1982
        %p1987 = scmp.eq.s32.totalorder %s35, 1
        // Predicated region
        $region97: #{_lambda_.1} parent=91 // pred_check
          %p1988 = pneg %p1987
        $region98: #{_lambda_.1} parent=91 // pred_check_branch
          %1990 = sbr.rel (%p1988) target = $region100
        $region99: #{_lambda_.1} parent=91 // pred_region
          %v1991 = vld [vmem:[#allocation2] sm:$0xff]
          %v1992 = vld [vmem:[#allocation2 + $0x8] sm:$0xff]
          %v1993 = vld [vmem:[#allocation2 + $0x10] sm:$0xff]
          %v1994 = vld [vmem:[#allocation2 + $0x18] sm:$0xff]
          %v1995 = vld [vmem:[%s16] sm:$0x1]
          %v1996 = vld [vmem:[%s17] sm:$0x1]
          %v1997 = vsel %vm875, %v1991, 0.0
          %1998 = vadd.xlane.f32.xlu0 %v1997
          %v1999 = vpop.xlane.xlu0 %1998
          %v2000 = vsel %vm875, %v1992, 0.0
          %2001 = vadd.xlane.f32.xlu0 %v2000
          %v2002 = vpop.xlane.xlu0 %2001
          %v2003 = vsel %vm875, %v1993, 0.0
          %2004 = vadd.xlane.f32.xlu0 %v2003
          %v2005 = vpop.xlane.xlu0 %2004
          %v2006 = vsel %vm875, %v1994, 0.0
          %2007 = vadd.xlane.f32.xlu0 %v2006
          %v2008 = vpop.xlane.xlu0 %2007
          %v2009 = vmul.f32 %v1999, %v894
          %v2010 = vmul.f32 %v2002, %v894
          %v2011 = vmul.f32 %v2005, %v894
          %v2012 = vmul.f32 %v2008, %v894
          %v2013 = vsub.f32 %v1991, %v2009
          %v2014 = vsub.f32 %v1992, %v2010
          %v2015 = vsub.f32 %v1993, %v2011
          %v2016 = vsub.f32 %v1994, %v2012
          %v2017 = vmul.f32 %v2013, %v2013
          %v2018 = vmul.f32 %v2014, %v2014
          %v2019 = vmul.f32 %v2015, %v2015
          %v2020 = vmul.f32 %v2016, %v2016
          %v2021 = vsel %vm875, %v2017, 0.0
          %2022 = vadd.xlane.f32.xlu0 %v2021
          %v2023 = vpop.xlane.xlu0 %2022
          %v2024 = vsel %vm875, %v2018, 0.0
          %2025 = vadd.xlane.f32.xlu0 %v2024
          %v2026 = vpop.xlane.xlu0 %2025
          %v2027 = vsel %vm875, %v2019, 0.0
          %2028 = vadd.xlane.f32.xlu0 %v2027
          %v2029 = vpop.xlane.xlu0 %2028
          %v2030 = vsel %vm875, %v2020, 0.0
          %2031 = vadd.xlane.f32.xlu0 %v2030
          %v2032 = vpop.xlane.xlu0 %2031
          %v2033 = vmul.f32 %v2023, %v894
          %v2034 = vmul.f32 %v2026, %v894
          %v2035 = vmul.f32 %v2029, %v894
          %v2036 = vmul.f32 %v2032, %v894
          %v2037 = vadd.f32 %v2033, 1e-06
          %v2038 = vadd.f32 %v2034, 1e-06
          %v2039 = vadd.f32 %v2035, 1e-06
          %v2040 = vadd.f32 %v2036, 1e-06
          %v2041 = vrsqrt.pop %v2037
          %v2042 = vmul.f32 %v2041, %v2037
          %v2043 = vmul.f32 %v2042, %v2041
          %v2044 = vmul.f32 0.5, %v2043
          %v2045 = vsub.f32 1.5, %v2044
          %v2046 = vmul.f32 %v2041, %v2045
          %vm2047 = vweird.f32 %v2037
          %vm2048 = vweird.f32 %v2041
          %vm2049 = vmor %vm2047, %vm2048
          %v2050 = vsel %vm2049, %v2041, %v2046
          %v2051 = vrsqrt.pop %v2038
          %v2052 = vmul.f32 %v2051, %v2038
          %v2053 = vmul.f32 %v2052, %v2051
          %v2054 = vmul.f32 0.5, %v2053
          %v2055 = vsub.f32 1.5, %v2054
          %v2056 = vmul.f32 %v2051, %v2055
          %vm2057 = vweird.f32 %v2038
          %vm2058 = vweird.f32 %v2051
          %vm2059 = vmor %vm2057, %vm2058
          %v2060 = vsel %vm2059, %v2051, %v2056
          %v2061 = vrsqrt.pop %v2039
          %v2062 = vmul.f32 %v2061, %v2039
          %v2063 = vmul.f32 %v2062, %v2061
          %v2064 = vmul.f32 0.5, %v2063
          %v2065 = vsub.f32 1.5, %v2064
          %v2066 = vmul.f32 %v2061, %v2065
          %vm2067 = vweird.f32 %v2039
          %vm2068 = vweird.f32 %v2061
          %vm2069 = vmor %vm2067, %vm2068
          %v2070 = vsel %vm2069, %v2061, %v2066
          %v2071 = vrsqrt.pop %v2040
          %v2072 = vmul.f32 %v2071, %v2040
          %v2073 = vmul.f32 %v2072, %v2071
          %v2074 = vmul.f32 0.5, %v2073
          %v2075 = vsub.f32 1.5, %v2074
          %v2076 = vmul.f32 %v2071, %v2075
          %vm2077 = vweird.f32 %v2040
          %vm2078 = vweird.f32 %v2071
          %vm2079 = vmor %vm2077, %vm2078
          %v2080 = vsel %vm2079, %v2071, %v2076
          %v2081 = vmul.f32 %v2013, %v2050
          %v2082 = vmul.f32 %v2014, %v2060
          %v2083 = vmul.f32 %v2015, %v2070
          %v2084 = vmul.f32 %v2016, %v2080
          %v2086 = vperm.slane %v1995, 0
          %v2088 = vmul.f32 %v2081, %v2086
          %v2089 = vmul.f32 %v2082, %v2086
          %v2090 = vmul.f32 %v2083, %v2086
          %v2091 = vmul.f32 %v2084, %v2086
          %v2093 = vperm.slane %v1996, 0
          %v2095 = vadd.f32 %v2088, %v2093
          %v2096 = vadd.f32 %v2089, %v2093
          %v2097 = vadd.f32 %v2090, %v2093
          %v2098 = vadd.f32 %v2091, %v2093
          %v2099 = vpack.c.bf16 %v2095, %v2095
          %v2100 = vpack.c.bf16 %v2096, %v2096
          %v2101 = vpack.c.bf16 %v2097, %v2097
          %v2102 = vpack.c.bf16 %v2098, %v2098
          %vm2103 = vcmask 257024
          %2104 = vst.msk [vmem:[#allocation4] sm:$0xf] %vm2103, %v2099
          %2105 = vst.msk [vmem:[#allocation4 + $0x4] sm:$0xf] %vm2103, %v2100
          %2106 = vst.msk [vmem:[#allocation4 + $0x8] sm:$0xf] %vm2103, %v2101
          %2107 = vst.msk [vmem:[#allocation4 + $0xc] sm:$0xf] %vm2103, %v2102
        $region100: #{_lambda_.1} parent=91 // pred_fallthru
          _
        // Predicated region
        $region101: #{_lambda_.1} parent=91 // pred_check
          %p2108 = pneg %p503
        $region102: #{_lambda_.1} parent=91 // pred_check_branch
          %2110 = sbr.rel (%p2108) target = $region104
        $region103: #{_lambda_.1} parent=91 // pred_region
          %s2111 = smul.u32 2, %s34
          %2113 = vsyncadd [#allocation5], 0
          %s2114 = smul.addr %s2111, 2
          %s2115 = smul.addr %s2114, 4
          %s2116 = scalar_lea.hbm %s18, %s2115
          %s2117 = sshll.u32 [#allocation4], 4
          %s2118 = int_to_ptr.vmem [resolvable:$true] %s2117
          %s2119 = sshll.u32 %s2116, 4
          %s2120 = int_to_ptr.hbm [resolvable:$true] %s2119
          %2125 = dma.vmem_to_hbm [thread:$0]  %s2118, 256, %s2120, [#allocation5], 64, 64, 4
        $region104: #{_lambda_.1} parent=91 // pred_fallthru
          _
        // Predicated region
        $region105: #{_lambda_.1} parent=91 // pred_check
          %p2126 = pneg %p503
        $region106: #{_lambda_.1} parent=91 // pred_check_branch
          %2128 = sbr.rel (%p2126) target = $region108
        $region107: #{_lambda_.1} parent=91 // pred_region
          %2130 = dma.done [#allocation5], 256
        $region108: #{_lambda_.1} parent=91 // pred_fallthru
          _
      $region92: #{_lambda_.1} parent=5 // pred_fallthru
        _
      %p2131 = scmp.le.s32.totalorder 2, %s25
      // Predicated region
      $region109: #{_lambda_.1} parent=5 // pred_check
        %p2132 = pneg %p2131
      $region110: #{_lambda_.1} parent=5 // pred_check_branch
        %2134 = sbr.rel (%p2132) target = $region112
      $region111: #{_lambda_.1} parent=5 // pred_region
        %s2135 = ssub.s32 %s25, 2
      $region112: #{_lambda_.1} parent=5 // pred_fallthru
        _
    $region6: #{_lambda_.1} parent=1 // loop_footer
      %s29 = sadd.s32 1, %s25
    $region7: #{_lambda_.1} parent=1 // loop_footer_branch
      %24 = sbr.rel target = $region3
    $region8: #{_lambda_.1} parent=1 // loop_exit
      _
    %2136 = vsyncpa [#allocation5], 1
    %s2137 = scalar_lea.sflag [#allocation5], 1
    %2138 = vsyncpa %s2137, 1

</llo_original>
